<compile_context>
chip_gen: v7x
topology: tpu7x:2x2x1
jax: 0.10.0
libtpu: 0.0.40
codegen_flags: <defaults>
</compile_context>

<pallas_src>
import math
from functools import partial

import jax
import jax.numpy as jnp
import numpy as np
from jax import lax
from jax.experimental import pallas as pl
from jax.experimental.pallas import tpu as pltpu


def _round_up(x, m):
    return (x + m - 1) // m * m


def _vmem_budget():
    """Returns (tile budget bytes, vmem_limit_bytes) from the chip's VMEM size."""
    cap = 64 * 1024 * 1024            # conservative fallback (v7x per-core VMEM)
    try:
        cap = int(pltpu.get_tpu_info().vmem_capacity_bytes)
    except Exception:
        pass
    limit = max(32 << 20, min(cap * 3 // 4, 112 << 20))   # ~96 MiB on 128-MiB parts
    budget = max(8 << 20, min(cap * 9 // 20, 64 << 20))   # ~48-57 MiB on 128-MiB parts
    return budget, limit


def _choose_tiles(NH, S, E, D, itemsize):
    """Pick (bn, bs, NH_pad, S_pad).  The budget counts the double-buffered K/V
    tiles plus the q/out blocks and f32 scratch, all with (8,128) padding."""
    budget, _ = _vmem_budget()
    lane = lambda x: _round_up(max(int(x), 1), 128)

    def row_bytes(bs_):
        kv = 2 * bs_ * (lane(E) + lane(D)) * itemsize      # double-buffered K+V
        qo = 2 * 8 * (lane(E) + lane(D)) * itemsize        # q and out blocks
        scr = 8 * (2 * 128 + lane(D)) * 4                  # m, l, acc scratch
        return kv + qo + scr

    bs = max(8, min(256, _round_up(S, 8)))
    while bs > 8 and 8 * row_bytes(bs) > budget:           # huge-E/D fallback
        bs = max(8, _round_up(bs // 2, 8))

    bn = max(8, min(512, (budget // row_bytes(bs)) // 8 * 8))
    if NH >= 16:
        # keep >= 2 steps on the "parallel" axis (v7x megacore: 2 TCs/chip)
        bn = min(bn, max(8, _round_up(pl.cdiv(NH, 2), 8)))
    bn = max(8, min(bn, _round_up(NH, 8)))
    NH_pad = _round_up(NH, bn)
    S_pad = _round_up(S, bs)
    return bn, bs, NH_pad, S_pad


def _fit_tile(dim, tile):
    """Largest multiple of 8 <= tile that divides dim (dim is a multiple of 8)."""
    t = max(8, min(dim, (int(tile) // 8) * 8))
    while dim % t:
        t -= 8
    return t


# ---------------------------------------------------------------------------
# kernel
# ---------------------------------------------------------------------------
def _attn_kernel(meta_ref, q_ref, k_ref, v_ref, o_ref, m_sc, l_sc, acc_sc, *,
                 softmax_temp, block_s):
    # meta_ref (SMEM): [0] = valid length S, [1] = last valid S-block index.
    # q_ref: (bn, 1, E)   k_ref: (bn, bs, E)   v_ref: (bn, bs, D)
    # o_ref: (bn, 1, D)   scratch: m/l (bn,1,1) f32, acc (bn,1,D) f32
    j = pl.program_id(1)
    length = meta_ref[0]

    @pl.when(j == 0)
    def _init():
        m_sc[...] = jnp.full_like(m_sc, -jnp.inf)
        l_sc[...] = jnp.zeros_like(l_sc)
        acc_sc[...] = jnp.zeros_like(acc_sc)

    # Blocks entirely past the valid length are skipped; their K/V DMA is also
    # elided because the index_map clamps them to the last valid block (block
    # index unchanged => the pipeline re-uses the previous copy).
    @pl.when(j * block_s < length)
    def _compute():
        q = q_ref[...]                                     # (bn, 1, E)
        k = k_ref[...]                                     # (bn, bs, E)
        # Batched (M=1) matmul, f32 accumulation on the MXU.
        s = jnp.einsum('bqe,bke->bqk', q, k,
                       preferred_element_type=jnp.float32) * softmax_temp
        pos = j * block_s + lax.broadcasted_iota(jnp.int32, (1, 1, block_s), 2)
        s = jnp.where(pos < length, s, -1e30)              # mask invalid tail

        m_prev = m_sc[...]
        m_new = jnp.maximum(m_prev, jnp.max(s, axis=-1, keepdims=True))
        alpha = jnp.exp(m_prev - m_new)                    # 0 at the first block
        p = jnp.exp(s - m_new)                             # (bn, 1, bs) f32
        l_sc[...] = alpha * l_sc[...] + jnp.sum(p, axis=-1, keepdims=True)
        acc_sc[...] = alpha * acc_sc[...] + jnp.einsum(
            'bqk,bkd->bqd', p.astype(v_ref.dtype), v_ref[...],
            preferred_element_type=jnp.float32)            # (bn, 1, D)
        m_sc[...] = m_new

    @pl.when(j == pl.num_programs(1) - 1)
    def _finalize():
        # exact divide: runs once per NH tile, so the approx reciprocal would
        # save nothing while costing accuracy.
        o_ref[...] = (acc_sc[...] / l_sc[...]).astype(o_ref.dtype)


def _flash_decode_attention(q3, keys, values, length, *, softmax_temp, bn, bs,
                            out_dtype):
    """q3 (NH_pad,1,E), keys (NH_pad,S_pad,E), values (NH_pad,S_pad,D); only the
    first `length` positions along S are valid."""
    NH_pad, _, E = q3.shape
    S_pad = keys.shape[1]
    D = values.shape[2]
    length = jnp.asarray(length, jnp.int32)
    meta = jnp.stack([length, jnp.maximum(length - 1, 0) // bs]).astype(jnp.int32)
    _, vmem_limit = _vmem_budget()

    grid = (NH_pad // bn, S_pad // bs)
    out = pl.pallas_call(
        partial(_attn_kernel, softmax_temp=float(softmax_temp), block_s=bs),
        out_shape=jax.ShapeDtypeStruct((NH_pad, 1, D), out_dtype),
        grid_spec=pltpu.PrefetchScalarGridSpec(
            num_scalar_prefetch=1,
            grid=grid,
            in_specs=[
                pl.BlockSpec((bn, 1, E), lambda i, j, m: (i, 0, 0)),
                pl.BlockSpec((bn, bs, E),
                             lambda i, j, m: (i, jnp.minimum(j, m[1]), 0)),
                pl.BlockSpec((bn, bs, D),
                             lambda i, j, m: (i, jnp.minimum(j, m[1]), 0)),
            ],
            out_specs=pl.BlockSpec((bn, 1, D), lambda i, j, m: (i, 0, 0)),
            scratch_shapes=[
                pltpu.VMEM((bn, 1, 1), jnp.float32),   # running max m
                pltpu.VMEM((bn, 1, 1), jnp.float32),   # running sum l
                pltpu.VMEM((bn, 1, D), jnp.float32),   # output accumulator
            ]),
        compiler_params=pltpu.CompilerParams(
            dimension_semantics=("parallel", "arbitrary"),
            vmem_limit_bytes=vmem_limit),
    )(meta, q3, keys, values)
    return out


# ---------------------------------------------------------------------------
# fast decode-loop API (no per-step concat)
# ---------------------------------------------------------------------------
def init_recurrent_state(N, H, E, D, max_len, dtype=jnp.float32,
                         state_dtype=None, block_n=None, block_s=None):
    """Preallocate recurrent K/V buffers with capacity `max_len` and a length
    counter.  state_dtype=jnp.bfloat16 halves the per-step state HBM traffic."""
    state_dtype = dtype if state_dtype is None else state_dtype
    itemsize = jnp.dtype(state_dtype).itemsize
    bn, bs, NH_pad, S_pad = _choose_tiles(N * H, max_len, E, D, itemsize)
    if block_n is not None:
        bn = max(8, _round_up(int(block_n), 8))
        NH_pad = _round_up(N * H, bn)
    if block_s is not None:
        bs = max(8, _round_up(int(block_s), 8))
        S_pad = _round_up(max_len, bs)
    keys_buf = jnp.zeros((NH_pad, S_pad, E), state_dtype)
    values_buf = jnp.zeros((NH_pad, S_pad, D), state_dtype)
    return keys_buf, values_buf, jnp.zeros((), jnp.int32)


@partial(jax.jit, static_argnames=("softmax_temp", "block_n", "block_s"),
         donate_argnums=(3, 4))
def _step_impl(query, key, value, keys_buf, values_buf, length, *,
               softmax_temp, block_n, block_s):
    N, H, E = query.shape
    D = value.shape[-1]
    NH = N * H
    NH_pad, S_pad, _ = keys_buf.shape
    state_dtype = keys_buf.dtype

    bn, bs, _, _ = _choose_tiles(NH, S_pad, E, D, jnp.dtype(state_dtype).itemsize)
    if block_n is not None:
        bn = max(8, _round_up(int(block_n), 8))
    if block_s is not None:
        bs = max(8, _round_up(int(block_s), 8))
    bn = _fit_tile(NH_pad, bn)
    bs = _fit_tile(S_pad, bs)

    # In-place append of the new key/value row (buffers are donated, so this is
    # a single-row HBM write rather than a full-state copy).  Caller must keep
    # the number of steps < the preallocated capacity.
    keys_buf = lax.dynamic_update_slice(
        keys_buf, key.reshape(NH, 1, E).astype(state_dtype), (0, length, 0))
    values_buf = lax.dynamic_update_slice(
        values_buf, value.reshape(NH, 1, D).astype(state_dtype), (0, length, 0))
    new_len = length + 1

    q3 = query.reshape(NH, 1, E).astype(state_dtype)
    if NH_pad != NH:
        q3 = jnp.pad(q3, ((0, NH_pad - NH), (0, 0), (0, 0)))

    out = _flash_decode_attention(q3, keys_buf, values_buf, new_len,
                                  softmax_temp=softmax_temp, bn=bn, bs=bs,
                                  out_dtype=query.dtype)
    V = out[:NH, 0, :].reshape(N, H, D)
    return V, keys_buf, values_buf, new_len


def recurrent_full_attention_step(query, key, value, state, softmax_temp=None,
                                  block_n=None, block_s=None):
    """Fast decode step.  state = (keys_buf, values_buf, length) from
    init_recurrent_state.  Returns (V, new_state)."""
    if softmax_temp is None:
        softmax_temp = 1.0 / math.sqrt(query.shape[-1])
    keys_buf, values_buf, length = state
    V, kb, vb, ln = _step_impl(query, key, value, keys_buf, values_buf, length,
                               softmax_temp=float(softmax_temp),
                               block_n=block_n, block_s=block_s)
    return V, (kb, vb, ln)


# ---------------------------------------------------------------------------
# torch-module-compatible API
# ---------------------------------------------------------------------------
def recurrent_full_attention(query, key, value, state=None, softmax_temp=None,
                             block_n=None, block_s=None):
    """Exact torch API: returns (V, [keys, values]) with the grown state in the
    module's (N,H,S,E)/(N,H,S,D) layout.  The concatenate is required by that
    return contract; decode loops should use init_recurrent_state /
    recurrent_full_attention_step, which append in place instead."""
    N, H, E = query.shape
    D = value.shape[-1]
    if softmax_temp is None:
        softmax_temp = 1.0 / math.sqrt(E)

    if state is not None:
        keys, values = state
        keys = jnp.concatenate([keys, key[:, :, None, :]], axis=2)
        values = jnp.concatenate([values, value[:, :, None, :]], axis=2)
    else:
        keys = key[:, :, None, :]
        values = value[:, :, None, :]
    S = keys.shape[2]
    NH = N * H

    bn, bs, NH_pad, S_pad = _choose_tiles(NH, S, E, D,
                                          jnp.dtype(query.dtype).itemsize)
    if block_n is not None:
        bn = max(8, _round_up(int(block_n), 8))
        NH_pad = _round_up(NH, bn)
    if block_s is not None:
        bs = max(8, _round_up(int(block_s), 8))
        S_pad = _round_up(S, bs)

    q3 = query.reshape(NH, 1, E)
    k3 = keys.reshape(NH, S, E)
    v3 = values.reshape(NH, S, D)
    if NH_pad != NH or S_pad != S:
        q3 = jnp.pad(q3, ((0, NH_pad - NH), (0, 0), (0, 0)))
        k3 = jnp.pad(k3, ((0, NH_pad - NH), (0, S_pad - S), (0, 0)))
        v3 = jnp.pad(v3, ((0, NH_pad - NH), (0, S_pad - S), (0, 0)))

    out = _flash_decode_attention(q3, k3, v3, S, softmax_temp=softmax_temp,
                                  bn=bn, bs=bs, out_dtype=query.dtype)
    V = out[:NH, 0, :].reshape(N, H, D)
    return V, [keys, values]


# ---------------------------------------------------------------------------
# reference + tests
# ---------------------------------------------------------------------------
def _reference(query, keys, values, softmax_temp=None):
    E = query.shape[-1]
    if softmax_temp is None:
        softmax_temp = 1.0 / math.sqrt(E)
    qk = jnp.einsum('nhe,nhse->nhs', query.astype(jnp.float32),
                    keys.astype(jnp.float32), precision='highest')
    a = jax.nn.softmax(softmax_temp * qk, axis=-1)
    return jnp.einsum('nhs,nhsd->nhd', a, values.astype(jnp.float32),
                      precision='highest')


if __name__ == "__main__":
    # ---- module-API path (exact torch forward semantics) -------------------
    N, H, E, D, S_prev = 2, 4, 32, 32, 8
    k_q, k_k, k_v, k_sk, k_sv = jax.random.split(jax.random.PRNGKey(0), 5)
    query = jax.random.normal(k_q, (N, H, E), dtype=jnp.float32)
    key_t = jax.random.normal(k_k, (N, H, E), dtype=jnp.float32)
    value = jax.random.normal(k_v, (N, H, D), dtype=jnp.float32)
    st_k = jax.random.normal(k_sk, (N, H, S_prev, E), dtype=jnp.float32)
    st_v = jax.random.normal(k_sv, (N, H, S_prev, D), dtype=jnp.float32)

    V0, state0 = recurrent_full_attention(query, key_t, value, state=None)
    V1, state1 = recurrent_full_attention(query, key_t, value, state=(st_k, st_v))
    jax.block_until_ready((V0, V1))

    np.testing.assert_allclose(np.asarray(V0),
                               np.asarray(_reference(query, state0[0], state0[1])),
                               atol=2e-3, rtol=2e-3)
    np.testing.assert_allclose(np.asarray(V1),
                               np.asarray(_reference(query, state1[0], state1[1])),
                               atol=2e-3, rtol=2e-3)
    assert state1[0].shape == (N, H, S_prev + 1, E)
    assert state1[1].shape == (N, H, S_prev + 1, D)

    # multiple NH blocks and multiple S blocks through the module API
    N2, H2, S2 = 4, 4, 20
    kq2, kk2, kv2, ksk2, ksv2 = jax.random.split(jax.random.PRNGKey(1), 5)
    q2 = jax.random.normal(kq2, (N2, H2, E), dtype=jnp.float32)
    k2 = jax.random.normal(kk2, (N2, H2, E), dtype=jnp.float32)
    v2 = jax.random.normal(kv2, (N2, H2, D), dtype=jnp.float32)
    sk2 = jax.random.normal(ksk2, (N2, H2, S2, E), dtype=jnp.float32)
    sv2 = jax.random.normal(ksv2, (N2, H2, S2, D), dtype=jnp.float32)
    V2, state2 = recurrent_full_attention(q2, k2, v2, state=(sk2, sv2),
                                          block_n=8, block_s=8)
    jax.block_until_ready(V2)
    np.testing.assert_allclose(np.asarray(V2),
                               np.asarray(_reference(q2, state2[0], state2[1])),
                               atol=2e-3, rtol=2e-3)

    # ---- buffered decode-loop path (no per-step concat) --------------------
    N3, H3, steps, max_len = 2, 8, 20, 40
    state = init_recurrent_state(N3, H3, E, D, max_len, dtype=jnp.float32,
                                 block_n=8, block_s=16)
    ref_keys, ref_vals = [], []
    rkey = jax.random.PRNGKey(2)
    for t in range(steps):
        rkey, a, b, c = jax.random.split(rkey, 4)
        qt = jax.random.normal(a, (N3, H3, E), dtype=jnp.float32)
        kt = jax.random.normal(b, (N3, H3, E), dtype=jnp.float32)
        vt = jax.random.normal(c, (N3, H3, D), dtype=jnp.float32)
        Vt, state = recurrent_full_attention_step(qt, kt, vt, state,
                                                  block_n=8, block_s=16)
        Vt = jax.block_until_ready(Vt)
        ref_keys.append(kt)
        ref_vals.append(vt)
        Vrt = _reference(qt, jnp.stack(ref_keys, axis=2),
                         jnp.stack(ref_vals, axis=2))
        np.testing.assert_allclose(np.asarray(Vt), np.asarray(Vrt),
                                   atol=2e-3, rtol=2e-3)
    assert int(state[2]) == steps

    # ---- buffered path with bf16 recurrent state ----------------------------
    state16 = init_recurrent_state(N3, H3, E, D, max_len, dtype=jnp.float32,
                                   state_dtype=jnp.bfloat16)
    kk_l, vv_l = [], []
    rkey = jax.random.PRNGKey(3)
    for t in range(4):
        rkey, a, b, c = jax.random.split(rkey, 4)
        qt = jax.random.normal(a, (N3, H3, E), dtype=jnp.float32)
        kt = jax.random.normal(b, (N3, H3, E), dtype=jnp.float32)
        vt = jax.random.normal(c, (N3, H3, D), dtype=jnp.float32)
        Vt, state16 = recurrent_full_attention_step(qt, kt, vt, state16)
        kk_l.append(kt)
        vv_l.append(vt)
    Vt = jax.block_until_ready(Vt)
    Vrt = _reference(qt, jnp.stack(kk_l, axis=2), jnp.stack(vv_l, axis=2))
    np.testing.assert_allclose(np.asarray(Vt), np.asarray(Vrt),
                               atol=3e-2, rtol=3e-2)

    print("KERNEL_OK")
</pallas_src>

<mosaic_0001>
module attributes {stable_mosaic.version = 11 : i64} {
  func.func @_attn_kernel(%arg0: i32, %arg1: i32, %arg2: memref<2xi32, #tpu.memory_space<smem>>, %arg3: memref<8x1x32xf32, #tpu.memory_space<vmem>>, %arg4: memref<8x8x32xf32, #tpu.memory_space<vmem>>, %arg5: memref<8x8x32xf32, #tpu.memory_space<vmem>>, %arg6: memref<8x1x32xf32, #tpu.memory_space<vmem>>, %arg7: memref<8x1x1xf32, #tpu.memory_space<vmem>>, %arg8: memref<8x1x1xf32, #tpu.memory_space<vmem>>, %arg9: memref<8x1x32xf32, #tpu.memory_space<vmem>>) attributes {dimension_semantics = [#tpu.dimension_semantics<parallel>, #tpu.dimension_semantics<arbitrary>], iteration_bounds = array<i64: 1, 1>, scalar_prefetch = 1 : i64, scratch_operands = 3 : i64, tpu.core_type = #tpu.core_type<tc>, window_params = [{transform_indices = @transform_0, window_bounds = array<i64: 8, 1, 32>}, {transform_indices = @transform_1, window_bounds = array<i64: 8, 8, 32>}, {transform_indices = @transform_2, window_bounds = array<i64: 8, 8, 32>}, {transform_indices = @transform_3, window_bounds = array<i64: 8, 1, 32>}]} {
    %c0 = arith.constant 0 : index
    %0 = memref.load %arg2[%c0] : memref<2xi32, #tpu.memory_space<smem>>
    %c0_i32 = arith.constant 0 : i32
    %1 = arith.cmpi eq, %arg1, %c0_i32 : i32
    %2 = arith.extui %1 : i1 to i32
    %c0_i32_0 = arith.constant 0 : i32
    %3 = arith.cmpi ne, %2, %c0_i32_0 : i32
    scf.if %3 {
      %cst = arith.constant 0xFF800000 : f32
      %11 = vector.broadcast %cst : f32 to vector<8x1x1xf32>
      %c0_4 = arith.constant 0 : index
      %c0_5 = arith.constant 0 : index
      %c0_6 = arith.constant 0 : index
      %12 = vector.load %arg7[%c0_4, %c0_5, %c0_6] : memref<8x1x1xf32, #tpu.memory_space<vmem>>, vector<8x1x1xf32>
      tpu.vector_store %arg7[%c0_4, %c0_5, %c0_6], %11 {strides = array<i32>} : memref<8x1x1xf32, #tpu.memory_space<vmem>>, vector<8x1x1xf32>,
      %cst_7 = arith.constant 0.000000e+00 : f32
      %13 = vector.broadcast %cst_7 : f32 to vector<8x1x1xf32>
      %c0_8 = arith.constant 0 : index
      %c0_9 = arith.constant 0 : index
      %c0_10 = arith.constant 0 : index
      %14 = vector.load %arg8[%c0_8, %c0_9, %c0_10] : memref<8x1x1xf32, #tpu.memory_space<vmem>>, vector<8x1x1xf32>
      tpu.vector_store %arg8[%c0_8, %c0_9, %c0_10], %13 {strides = array<i32>} : memref<8x1x1xf32, #tpu.memory_space<vmem>>, vector<8x1x1xf32>,
      %cst_11 = arith.constant 0.000000e+00 : f32
      %15 = vector.broadcast %cst_11 : f32 to vector<8x1x32xf32>
      %c0_12 = arith.constant 0 : index
      %c0_13 = arith.constant 0 : index
      %c0_14 = arith.constant 0 : index
      %16 = vector.load %arg9[%c0_12, %c0_13, %c0_14] : memref<8x1x32xf32, #tpu.memory_space<vmem>>, vector<8x1x32xf32>
      tpu.vector_store %arg9[%c0_12, %c0_13, %c0_14], %15 {strides = array<i32>} : memref<8x1x32xf32, #tpu.memory_space<vmem>>, vector<8x1x32xf32>,
    } else {
    }
    %c8_i32 = arith.constant 8 : i32
    %4 = arith.muli %arg1, %c8_i32 : i32
    %5 = arith.cmpi slt, %4, %0 : i32
    %6 = arith.extui %5 : i1 to i32
    %c0_i32_1 = arith.constant 0 : i32
    %7 = arith.cmpi ne, %6, %c0_i32_1 : i32
    scf.if %7 {
      %c0_4 = arith.constant 0 : index
      %c0_5 = arith.constant 0 : index
      %c0_6 = arith.constant 0 : index
      %11 = vector.load %arg3[%c0_4, %c0_5, %c0_6] : memref<8x1x32xf32, #tpu.memory_space<vmem>>, vector<8x1x32xf32>
      %c0_7 = arith.constant 0 : index
      %c0_8 = arith.constant 0 : index
      %c0_9 = arith.constant 0 : index
      %12 = vector.load %arg4[%c0_7, %c0_8, %c0_9] : memref<8x8x32xf32, #tpu.memory_space<vmem>>, vector<8x8x32xf32>
      "tpu.trace_start"() <{level = 10 : i32, message = "bqe,bke->bqk"}> : () -> ()
      %cst = arith.constant dense<0.000000e+00> : vector<8x1x8xf32>
      %13 = tpu.matmul %11, %12, %cst {dimension_numbers = #tpu.dot_dimension_numbers<[2], [2], [1], [1], [0, 0, 0, 1, 1, 1], [0], [0]>} : vector<8x1x32xf32>, vector<8x8x32xf32>, vector<8x1x8xf32> -> vector<8x1x8xf32>
      "tpu.trace_stop"() : () -> ()
      %cst_10 = arith.constant 0.176776692 : f32
      %14 = vector.broadcast %cst_10 : f32 to vector<8x1x8xf32>
      %15 = arith.mulf %13, %14 : vector<8x1x8xf32>
      %c8_i32_11 = arith.constant 8 : i32
      %16 = arith.muli %arg1, %c8_i32_11 : i32
      %17 = tpu.iota {dimensions = array<i32: 2>} : vector<1x1x8xi32>
      %18 = vector.broadcast %16 : i32 to vector<1x1x8xi32>
      %19 = arith.addi %18, %17 : vector<1x1x8xi32>
      %20 = vector.broadcast %0 : i32 to vector<1x1x8xi32>
      %21 = arith.cmpi slt, %19, %20 : vector<1x1x8xi32>
      %cst_12 = arith.constant -1.000000e+30 : f32
      %22 = vector.shape_cast %21 : vector<1x1x8xi1> to vector<1x1x8xi1>
      %23 = vector.broadcast %22 : vector<1x1x8xi1> to vector<8x1x8xi1>
      %24 = vector.broadcast %cst_12 : f32 to vector<8x1x8xf32>
      %25 = arith.select %23, %15, %24 : vector<8x1x8xi1>, vector<8x1x8xf32>
      %c0_13 = arith.constant 0 : index
      %c0_14 = arith.constant 0 : index
      %c0_15 = arith.constant 0 : index
      %26 = vector.load %arg7[%c0_13, %c0_14, %c0_15] : memref<8x1x1xf32, #tpu.memory_space<vmem>>, vector<8x1x1xf32>
      %cst_16 = arith.constant dense<0xFF800000> : vector<8x1xf32>
      %27 = vector.multi_reduction <maximumf>, %25, %cst_16 [2] : vector<8x1x8xf32> to vector<8x1xf32>
      %28 = vector.shape_cast %27 : vector<8x1xf32> to vector<8x1x1xf32>
      %29 = arith.maximumf %26, %28 : vector<8x1x1xf32>
      %30 = arith.subf %26, %29 : vector<8x1x1xf32>
      %31 = math.exp %30 : vector<8x1x1xf32>
      %32 = vector.broadcast %29 : vector<8x1x1xf32> to vector<8x1x8xf32>
      %33 = arith.subf %25, %32 : vector<8x1x8xf32>
      %34 = math.exp %33 : vector<8x1x8xf32>
      %c0_17 = arith.constant 0 : index
      %c0_18 = arith.constant 0 : index
      %c0_19 = arith.constant 0 : index
      %35 = vector.load %arg8[%c0_17, %c0_18, %c0_19] : memref<8x1x1xf32, #tpu.memory_space<vmem>>, vector<8x1x1xf32>
      %36 = arith.mulf %31, %35 : vector<8x1x1xf32>
      %cst_20 = arith.constant dense<0.000000e+00> : vector<8x1xf32>
      %37 = vector.multi_reduction <add>, %34, %cst_20 [2] : vector<8x1x8xf32> to vector<8x1xf32>
      %38 = vector.shape_cast %37 : vector<8x1xf32> to vector<8x1x1xf32>
      %39 = arith.addf %36, %38 : vector<8x1x1xf32>
      %c0_21 = arith.constant 0 : index
      %c0_22 = arith.constant 0 : index
      %c0_23 = arith.constant 0 : index
      %40 = vector.load %arg8[%c0_21, %c0_22, %c0_23] : memref<8x1x1xf32, #tpu.memory_space<vmem>>, vector<8x1x1xf32>
      tpu.vector_store %arg8[%c0_21, %c0_22, %c0_23], %39 {strides = array<i32>} : memref<8x1x1xf32, #tpu.memory_space<vmem>>, vector<8x1x1xf32>,
      %c0_24 = arith.constant 0 : index
      %c0_25 = arith.constant 0 : index
      %c0_26 = arith.constant 0 : index
      %41 = vector.load %arg9[%c0_24, %c0_25, %c0_26] : memref<8x1x32xf32, #tpu.memory_space<vmem>>, vector<8x1x32xf32>
      %42 = vector.broadcast %31 : vector<8x1x1xf32> to vector<8x1x32xf32>
      %43 = arith.mulf %42, %41 : vector<8x1x32xf32>
      %c0_27 = arith.constant 0 : index
      %c0_28 = arith.constant 0 : index
      %c0_29 = arith.constant 0 : index
      %44 = vector.load %arg5[%c0_27, %c0_28, %c0_29] : memref<8x8x32xf32, #tpu.memory_space<vmem>>, vector<8x8x32xf32>
      "tpu.trace_start"() <{level = 10 : i32, message = "bqk,bkd->bqd"}> : () -> ()
      %cst_30 = arith.constant dense<0.000000e+00> : vector<8x1x32xf32>
      %45 = tpu.matmul %34, %44, %cst_30 {dimension_numbers = #tpu.dot_dimension_numbers<[2], [1], [1], [2], [0, 0, 0, 1, 1, 2], [0], [0]>} : vector<8x1x8xf32>, vector<8x8x32xf32>, vector<8x1x32xf32> -> vector<8x1x32xf32>
      "tpu.trace_stop"() : () -> ()
      %46 = arith.addf %43, %45 : vector<8x1x32xf32>
      %c0_31 = arith.constant 0 : index
      %c0_32 = arith.constant 0 : index
      %c0_33 = arith.constant 0 : index
      %47 = vector.load %arg9[%c0_31, %c0_32, %c0_33] : memref<8x1x32xf32, #tpu.memory_space<vmem>>, vector<8x1x32xf32>
      tpu.vector_store %arg9[%c0_31, %c0_32, %c0_33], %46 {strides = array<i32>} : memref<8x1x32xf32, #tpu.memory_space<vmem>>, vector<8x1x32xf32>,
      %c0_34 = arith.constant 0 : index
      %c0_35 = arith.constant 0 : index
      %c0_36 = arith.constant 0 : index
      %48 = vector.load %arg7[%c0_34, %c0_35, %c0_36] : memref<8x1x1xf32, #tpu.memory_space<vmem>>, vector<8x1x1xf32>
      tpu.vector_store %arg7[%c0_34, %c0_35, %c0_36], %29 {strides = array<i32>} : memref<8x1x1xf32, #tpu.memory_space<vmem>>, vector<8x1x1xf32>,
    } else {
    }
    %c0_i32_2 = arith.constant 0 : i32
    %8 = arith.cmpi eq, %arg1, %c0_i32_2 : i32
    %9 = arith.extui %8 : i1 to i32
    %c0_i32_3 = arith.constant 0 : i32
    %10 = arith.cmpi ne, %9, %c0_i32_3 : i32
    scf.if %10 {
      %c0_4 = arith.constant 0 : index
      %c0_5 = arith.constant 0 : index
      %c0_6 = arith.constant 0 : index
      %11 = vector.load %arg9[%c0_4, %c0_5, %c0_6] : memref<8x1x32xf32, #tpu.memory_space<vmem>>, vector<8x1x32xf32>
      %c0_7 = arith.constant 0 : index
      %c0_8 = arith.constant 0 : index
      %c0_9 = arith.constant 0 : index
      %12 = vector.load %arg8[%c0_7, %c0_8, %c0_9] : memref<8x1x1xf32, #tpu.memory_space<vmem>>, vector<8x1x1xf32>
      %13 = vector.broadcast %12 : vector<8x1x1xf32> to vector<8x1x32xf32>
      %14 = arith.divf %11, %13 : vector<8x1x32xf32>
      %c0_10 = arith.constant 0 : index
      %c0_11 = arith.constant 0 : index
      %c0_12 = arith.constant 0 : index
      %15 = vector.load %arg6[%c0_10, %c0_11, %c0_12] : memref<8x1x32xf32, #tpu.memory_space<vmem>>, vector<8x1x32xf32>
      tpu.vector_store %arg6[%c0_10, %c0_11, %c0_12], %14 {strides = array<i32>} : memref<8x1x32xf32, #tpu.memory_space<vmem>>, vector<8x1x32xf32>,
    } else {
    }
    return
  }
  func.func @transform_0(%arg0: i32, %arg1: i32, %arg2: memref<2xi32, #tpu.memory_space<smem>>) -> (i32, i32, i32) {
    %c0_i32 = arith.constant 0 : i32
    %c0_i32_0 = arith.constant 0 : i32
    %c0_i32_1 = arith.constant 0 : i32
    return %arg0, %c0_i32, %c0_i32_0 : i32, i32, i32
  }
  func.func @transform_1(%arg0: i32, %arg1: i32, %arg2: memref<2xi32, #tpu.memory_space<smem>>) -> (i32, i32, i32) {
    %c1 = arith.constant 1 : index
    %0 = memref.load %arg2[%c1] : memref<2xi32, #tpu.memory_space<smem>>
    %1 = arith.minsi %arg1, %0 : i32
    %c0_i32 = arith.constant 0 : i32
    %c0_i32_0 = arith.constant 0 : i32
    return %arg0, %1, %c0_i32 : i32, i32, i32
  }
  func.func @transform_2(%arg0: i32, %arg1: i32, %arg2: memref<2xi32, #tpu.memory_space<smem>>) -> (i32, i32, i32) {
    %c1 = arith.constant 1 : index
    %0 = memref.load %arg2[%c1] : memref<2xi32, #tpu.memory_space<smem>>
    %1 = arith.minsi %arg1, %0 : i32
    %c0_i32 = arith.constant 0 : i32
    %c0_i32_0 = arith.constant 0 : i32
    return %arg0, %1, %c0_i32 : i32, i32, i32
  }
  func.func @transform_3(%arg0: i32, %arg1: i32, %arg2: memref<2xi32, #tpu.memory_space<smem>>) -> (i32, i32, i32) {
    %c0_i32 = arith.constant 0 : i32
    %c0_i32_0 = arith.constant 0 : i32
    %c0_i32_1 = arith.constant 0 : i32
    return %arg0, %c0_i32, %c0_i32_0 : i32, i32, i32
  }
}

</mosaic_0001>

<llo_original>
// kernel: tpu_custom_call.1
$region0: #{tpu_custom_call.1}
  #allocation0 [shape = 'u32[]', space=smem, size = 0x4, offset = 0x4, fixed_abs, tag = 'smem constant byte address 0x4 - core index']
  #allocation1 [shape = 'u32[144,128]{1,0:T(1,128)}', space=vmem, size = 0x12000, scoped, tag = 'internal scratch']
  #allocation2 [shape = 'f32[8,1,1]{2,1,0:T(1,128)}', space=vmem, size = 0x1000, scoped, tag = 'scratch operand']
  #allocation3 [shape = 'f32[8,1,1]{2,1,0:T(1,128)}', space=vmem, size = 0x1000, scoped, tag = 'scratch operand']
  #allocation4 [shape = 'f32[8,1,32]{2,1,0:T(1,128)}', space=vmem, size = 0x1000, scoped, tag = 'scratch operand']
  #allocation5 [shape = 's32[1]{0}', space=sflag, size = 0x4, scoped, tag = 'scoped memory for tpu_custom_call.1']
  #allocation6 [shape = 'u8[512]{0}', space=smem, size = 0x200, scoped, tag = 'prefetched SMEM operand 0']
  %s0 = inlined_call_operand.hbm [shape: s32[2], index: 0, kind: input, shape index: {}]
  %s1 = inlined_call_operand.hbm [shape: f32[8,1,32], index: 1, kind: input, shape index: {}]
  %s2 = inlined_call_operand.hbm [shape: f32[8,8,32], index: 2, kind: input, shape index: {}]
  %s3 = inlined_call_operand.hbm [shape: f32[8,8,32], index: 3, kind: input, shape index: {}]
  %s4 = inlined_call_operand.hbm [shape: f32[8,1,32], index: 4, kind: output, shape index: {}]
  %s5 = sld [smem:[#allocation0]]
  $region46: #{tpu_custom_call.1} parent=0
    _
  %s7 = ssub.s32 1, %s5
  %s8 = scalar_select 0, %s7, %s5
  %10 = dma.hbm_to_smem %s0, 16, [#allocation6], [#allocation5]
  %11 = dma.done [#allocation5], 16
  %12 = sfence
  $region1: #{tpu_custom_call.1} parent=0
    #allocation7 [shape = 'u8[4096]{0}', space=vmem, size = 0x1000, scoped, tag = 'input window, operand 1, single buffered']
    #allocation8 [shape = 's32[1]{0}', space=sflag, size = 0x4, scoped, tag = 'scoped memory for tpu_custom_call.1']
    #allocation9 [shape = 's32[1]{0}', space=sflag, size = 0x4, scoped, tag = 'scoped memory for tpu_custom_call.1']
    #allocation10 [shape = 'u8[32768]{0}', space=vmem, size = 0x8000, scoped, tag = 'input window, operand 2, single buffered']
    #allocation11 [shape = 's32[1]{0}', space=sflag, size = 0x4, scoped, tag = 'scoped memory for tpu_custom_call.1']
    #allocation12 [shape = 'u8[32768]{0}', space=vmem, size = 0x8000, scoped, tag = 'input window, operand 3, single buffered']
    #allocation13 [shape = 'u8[4096]{0}', space=vmem, size = 0x1000, scoped, tag = 'output window, operand 0, single buffered']
    %13 = vsyncpa [#allocation8], 0
    %14 = vsyncpa [#allocation11], 0
    %15 = vsyncpa [#allocation9], 0
    // Predicated region
    $region2: #{tpu_custom_call.1} parent=1 // pred_check
      _
    $region3: #{tpu_custom_call.1} parent=1 // pred_check_branch
      %17 = sbr.rel (0) target = $region5
    $region4: #{tpu_custom_call.1} parent=1 // pred_region
      %s19 = ssub.s32 128, 128
      %20 = vsyncadd [#allocation8], %s19
      %s21 = sshll.u32 [#allocation7], 4
      %s22 = int_to_ptr.vmem [resolvable:$true] %s21
      %27 = dma.hbm_to_vmem [thread:$0]  %s1, 128, %s22, [#allocation8], 16, 16, 1
    $region5: #{tpu_custom_call.1} parent=1 // pred_fallthru
      _
    // Predicated region
    $region6: #{tpu_custom_call.1} parent=1 // pred_check
      _
    $region7: #{tpu_custom_call.1} parent=1 // pred_check_branch
      %29 = sbr.rel (0) target = $region9
    $region8: #{tpu_custom_call.1} parent=1 // pred_region
      %s30 = sld [smem:[#allocation6 + $0x1]]
      %p31 = scmp.lt.s32.totalorder 0, %s30
      %s32 = scalar_select %p31, 0, %s30
      %s34 = ssub.s32 1024, 1024
      %35 = vsyncadd [#allocation11], %s34
      %s36 = smul.addr %s32, 128
      %s37 = scalar_lea.hbm %s2, %s36
      %s38 = sshll.u32 [#allocation10], 4
      %s39 = int_to_ptr.vmem [resolvable:$true] %s38
      %44 = dma.hbm_to_vmem [thread:$0]  %s37, 1024, %s39, [#allocation11], 128, 128, 8
    $region9: #{tpu_custom_call.1} parent=1 // pred_fallthru
      _
    // Predicated region
    $region10: #{tpu_custom_call.1} parent=1 // pred_check
      _
    $region11: #{tpu_custom_call.1} parent=1 // pred_check_branch
      %46 = sbr.rel (0) target = $region13
    $region12: #{tpu_custom_call.1} parent=1 // pred_region
      %s47 = sld [smem:[#allocation6 + $0x1]]
      %p48 = scmp.lt.s32.totalorder 0, %s47
      %s49 = scalar_select %p48, 0, %s47
      %s51 = ssub.s32 1024, 1024
      %52 = vsyncadd [#allocation11], %s51
      %s53 = smul.addr %s49, 128
      %s54 = scalar_lea.hbm %s3, %s53
      %s55 = sshll.u32 [#allocation12], 4
      %s56 = int_to_ptr.vmem [resolvable:$true] %s55
      %61 = dma.hbm_to_vmem [thread:$0]  %s54, 1024, %s56, [#allocation11], 128, 128, 8
    $region13: #{tpu_custom_call.1} parent=1 // pred_fallthru
      _
    // Predicated region
    $region14: #{tpu_custom_call.1} parent=1 // pred_check
      _
    $region15: #{tpu_custom_call.1} parent=1 // pred_check_branch
      %63 = sbr.rel (0) target = $region17
    $region16: #{tpu_custom_call.1} parent=1 // pred_region
      %64 = dma.done [#allocation8], 128
    $region17: #{tpu_custom_call.1} parent=1 // pred_fallthru
      _
    // Predicated region
    $region18: #{tpu_custom_call.1} parent=1 // pred_check
      _
    $region19: #{tpu_custom_call.1} parent=1 // pred_check_branch
      %66 = sbr.rel (0) target = $region21
    $region20: #{tpu_custom_call.1} parent=1 // pred_region
      %67 = dma.done [#allocation11], 1024
    $region21: #{tpu_custom_call.1} parent=1 // pred_fallthru
      _
    // Predicated region
    $region22: #{tpu_custom_call.1} parent=1 // pred_check
      _
    $region23: #{tpu_custom_call.1} parent=1 // pred_check_branch
      %69 = sbr.rel (0) target = $region25
    $region24: #{tpu_custom_call.1} parent=1 // pred_region
      %70 = dma.done [#allocation11], 1024
    $region25: #{tpu_custom_call.1} parent=1 // pred_fallthru
      _
    %s71 = sld [smem:[#allocation6 + $0x1]]
    %p72 = scmp.lt.s32.totalorder 0, %s71
    %s73 = scalar_select %p72, 0, %s71
    %s74 = sld [smem:[#allocation6 + $0x1]]
    %p75 = scmp.lt.s32.totalorder 0, %s74
    %s76 = scalar_select %p75, 0, %s74
    %s77 = sld [smem:[#allocation6]]
    %p78 = scmp.eq.s32.totalorder 0, 0
    // Predicated region
    $region26: #{tpu_custom_call.1} parent=1 // pred_check
      %p79 = pneg %p78
    $region27: #{tpu_custom_call.1} parent=1 // pred_check_branch
      %81 = sbr.rel (%p79) target = $region29
    $region28: #{tpu_custom_call.1} parent=1 // pred_region
      %vm82 = vcmask 0
      %83 = vst.msk [vmem:[#allocation2] sm:$0x1] %vm82, -inf
      %84 = vst.msk [vmem:[#allocation2 + $0x1] sm:$0x1] %vm82, -inf
      %85 = vst.msk [vmem:[#allocation2 + $0x2] sm:$0x1] %vm82, -inf
      %86 = vst.msk [vmem:[#allocation2 + $0x3] sm:$0x1] %vm82, -inf
      %87 = vst.msk [vmem:[#allocation2 + $0x4] sm:$0x1] %vm82, -inf
      %88 = vst.msk [vmem:[#allocation2 + $0x5] sm:$0x1] %vm82, -inf
      %89 = vst.msk [vmem:[#allocation2 + $0x6] sm:$0x1] %vm82, -inf
      %90 = vst.msk [vmem:[#allocation2 + $0x7] sm:$0x1] %vm82, -inf
      %91 = vst.msk [vmem:[#allocation3] sm:$0x1] %vm82, 0.0
      %92 = vst.msk [vmem:[#allocation3 + $0x1] sm:$0x1] %vm82, 0.0
      %93 = vst.msk [vmem:[#allocation3 + $0x2] sm:$0x1] %vm82, 0.0
      %94 = vst.msk [vmem:[#allocation3 + $0x3] sm:$0x1] %vm82, 0.0
      %95 = vst.msk [vmem:[#allocation3 + $0x4] sm:$0x1] %vm82, 0.0
      %96 = vst.msk [vmem:[#allocation3 + $0x5] sm:$0x1] %vm82, 0.0
      %97 = vst.msk [vmem:[#allocation3 + $0x6] sm:$0x1] %vm82, 0.0
      %98 = vst.msk [vmem:[#allocation3 + $0x7] sm:$0x1] %vm82, 0.0
      %vm99 = vcmask 253952
      %100 = vst.msk [vmem:[#allocation4] sm:$0x1] %vm99, 0.0
      %101 = vst.msk [vmem:[#allocation4 + $0x1] sm:$0x1] %vm99, 0.0
      %102 = vst.msk [vmem:[#allocation4 + $0x2] sm:$0x1] %vm99, 0.0
      %103 = vst.msk [vmem:[#allocation4 + $0x3] sm:$0x1] %vm99, 0.0
      %104 = vst.msk [vmem:[#allocation4 + $0x4] sm:$0x1] %vm99, 0.0
      %105 = vst.msk [vmem:[#allocation4 + $0x5] sm:$0x1] %vm99, 0.0
      %106 = vst.msk [vmem:[#allocation4 + $0x6] sm:$0x1] %vm99, 0.0
      %107 = vst.msk [vmem:[#allocation4 + $0x7] sm:$0x1] %vm99, 0.0
    $region29: #{tpu_custom_call.1} parent=1 // pred_fallthru
      _
    %s108 = smul.u32 0, 8
    %p109 = scmp.lt.s32.totalorder %s108, %s77
    // Predicated region
    $region30: #{tpu_custom_call.1} parent=1 // pred_check
      %p110 = pneg %p109
    $region31: #{tpu_custom_call.1} parent=1 // pred_check_branch
      %112 = sbr.rel (%p110) target = $region33
    $region32: #{tpu_custom_call.1} parent=1 // pred_region
      %v113 = vld [vmem:[#allocation7] sm:$0x1]
      %v114 = vld [vmem:[#allocation7 + $0x1] sm:$0x1]
      %v115 = vld [vmem:[#allocation7 + $0x2] sm:$0x1]
      %v116 = vld [vmem:[#allocation7 + $0x3] sm:$0x1]
      %v117 = vld [vmem:[#allocation7 + $0x4] sm:$0x1]
      %v118 = vld [vmem:[#allocation7 + $0x5] sm:$0x1]
      %v119 = vld [vmem:[#allocation7 + $0x6] sm:$0x1]
      %v120 = vld [vmem:[#allocation7 + $0x7] sm:$0x1]
      %v121 = vld [vmem:[#allocation10] sm:$0xff]
      %v122 = vld [vmem:[#allocation10 + $0x8] sm:$0xff]
      %v123 = vld [vmem:[#allocation10 + $0x10] sm:$0xff]
      %v124 = vld [vmem:[#allocation10 + $0x18] sm:$0xff]
      %v125 = vld [vmem:[#allocation10 + $0x20] sm:$0xff]
      %v126 = vld [vmem:[#allocation10 + $0x28] sm:$0xff]
      %v127 = vld [vmem:[#allocation10 + $0x30] sm:$0xff]
      %v128 = vld [vmem:[#allocation10 + $0x38] sm:$0xff]
      %vm129 = vcmask 261120
      %v131 = vsel %vm129, %v113, 0
      %v134 = vsel %vm129, %v121, 0
      %136 = vmatprep.subr.mxu0 0.0
      %137 = vmatpush1.xpose.msra.mxu0 %v134
      %138 = vmatprep.subr.mxu0 0.0
      %139 = vmatpush1.xpose.msra.mxu0 0.0
      %140 = vmatprep.subr.mxu0 0.0
      %141 = vmatpush1.xpose.msra.mxu0 0.0
      %142 = vmatprep.subr.mxu0 0.0
      %143 = vmatpush1.xpose.msra.mxu0 0.0
      %144 = vmatprep.subr.mxu0 0.0
      %145 = vmatpush1.xpose.msra.mxu0 0.0
      %146 = vmatprep.subr.mxu0 0.0
      %147 = vmatpush1.xpose.msra.mxu0 0.0
      %148 = vmatprep.subr.mxu0 0.0
      %149 = vmatpush1.xpose.msra.mxu0 0.0
      %150 = vmatprep.subr.mxu0 0.0
      %151 = vmatpush1.xpose.msra.mxu0 0.0
      %152 = vmatprep.subr.mxu0 0.0
      %153 = vmatpush1.xpose.msra.mxu0 0.0
      %154 = vmatprep.subr.mxu0 0.0
      %155 = vmatpush1.xpose.msra.mxu0 0.0
      %156 = vmatprep.subr.mxu0 0.0
      %157 = vmatpush1.xpose.msra.mxu0 0.0
      %158 = vmatprep.subr.mxu0 0.0
      %159 = vmatpush1.xpose.msra.mxu0 0.0
      %160 = vmatprep.subr.mxu0 0.0
      %161 = vmatpush1.xpose.msra.mxu0 0.0
      %162 = vmatprep.subr.mxu0 0.0
      %163 = vmatpush1.xpose.msra.mxu0 0.0
      %164 = vmatprep.subr.mxu0 0.0
      %165 = vmatpush1.xpose.msra.mxu0 0.0
      %166 = vmatprep.subr.mxu0 0.0
      %167 = vmatpush1.xpose.msra.mxu0 0.0
      %168 = vmatprep.subr.mxu0 0.0
      %169 = vmatpush1.xpose.msra.mxu0 0.0
      %170 = vmatprep.subr.mxu0 0.0
      %171 = vmatpush1.xpose.msra.mxu0 0.0
      %172 = vmatprep.subr.mxu0 0.0
      %173 = vmatpush1.xpose.msra.mxu0 0.0
      %174 = vmatprep.subr.mxu0 0.0
      %175 = vmatpush1.xpose.msra.mxu0 0.0
      %176 = vmatprep.subr.mxu0 0.0
      %177 = vmatpush1.xpose.msra.mxu0 0.0
      %178 = vmatprep.subr.mxu0 0.0
      %179 = vmatpush1.xpose.msra.mxu0 0.0
      %180 = vmatprep.subr.mxu0 0.0
      %181 = vmatpush1.xpose.msra.mxu0 0.0
      %182 = vmatprep.subr.mxu0 0.0
      %183 = vmatpush1.xpose.msra.mxu0 0.0
      %184 = vmatprep.subr.mxu0 0.0
      %185 = vmatpush1.xpose.msra.mxu0 0.0
      %186 = vmatprep.subr.mxu0 0.0
      %187 = vmatpush1.xpose.msra.mxu0 0.0
      %188 = vmatprep.subr.mxu0 0.0
      %189 = vmatpush1.xpose.msra.mxu0 0.0
      %190 = vmatprep.subr.mxu0 0.0
      %191 = vmatpush1.xpose.msra.mxu0 0.0
      %192 = vmatprep.subr.mxu0 0.0
      %193 = vmatpush1.xpose.msra.mxu0 0.0
      %194 = vmatprep.subr.mxu0 0.0
      %195 = vmatpush1.xpose.msra.mxu0 0.0
      %196 = vmatprep.subr.mxu0 0.0
      %197 = vmatpush1.xpose.msra.mxu0 0.0
      %198 = vmatprep.subr.mxu0 0.0
      %199 = vmatpush1.xpose.msra.mxu0 0.0
      %200 = vmatprep.mubr.f32.mxu0 0.0
      %201 = vmatmul.mubr.f32.gmra.mrb[0].mxu0 %v131
      %v202 = vpop.f32.mrb[0].mxu0
      %v203 = vadd.f32 0.0, %v202
      %v204 = vpop.f32.mrb[0].mxu0
      %205 = vdwg.mxu0
      %v207 = vsel %vm129, %v114, 0
      %v210 = vsel %vm129, %v122, 0
      %212 = vmatprep.subr.mxu0 0.0
      %213 = vmatpush1.xpose.msra.mxu0 %v210
      %214 = vmatprep.subr.mxu0 0.0
      %215 = vmatpush1.xpose.msra.mxu0 0.0
      %216 = vmatprep.subr.mxu0 0.0
      %217 = vmatpush1.xpose.msra.mxu0 0.0
      %218 = vmatprep.subr.mxu0 0.0
      %219 = vmatpush1.xpose.msra.mxu0 0.0
      %220 = vmatprep.subr.mxu0 0.0
      %221 = vmatpush1.xpose.msra.mxu0 0.0
      %222 = vmatprep.subr.mxu0 0.0
      %223 = vmatpush1.xpose.msra.mxu0 0.0
      %224 = vmatprep.subr.mxu0 0.0
      %225 = vmatpush1.xpose.msra.mxu0 0.0
      %226 = vmatprep.subr.mxu0 0.0
      %227 = vmatpush1.xpose.msra.mxu0 0.0
      %228 = vmatprep.subr.mxu0 0.0
      %229 = vmatpush1.xpose.msra.mxu0 0.0
      %230 = vmatprep.subr.mxu0 0.0
      %231 = vmatpush1.xpose.msra.mxu0 0.0
      %232 = vmatprep.subr.mxu0 0.0
      %233 = vmatpush1.xpose.msra.mxu0 0.0
      %234 = vmatprep.subr.mxu0 0.0
      %235 = vmatpush1.xpose.msra.mxu0 0.0
      %236 = vmatprep.subr.mxu0 0.0
      %237 = vmatpush1.xpose.msra.mxu0 0.0
      %238 = vmatprep.subr.mxu0 0.0
      %239 = vmatpush1.xpose.msra.mxu0 0.0
      %240 = vmatprep.subr.mxu0 0.0
      %241 = vmatpush1.xpose.msra.mxu0 0.0
      %242 = vmatprep.subr.mxu0 0.0
      %243 = vmatpush1.xpose.msra.mxu0 0.0
      %244 = vmatprep.subr.mxu0 0.0
      %245 = vmatpush1.xpose.msra.mxu0 0.0
      %246 = vmatprep.subr.mxu0 0.0
      %247 = vmatpush1.xpose.msra.mxu0 0.0
      %248 = vmatprep.subr.mxu0 0.0
      %249 = vmatpush1.xpose.msra.mxu0 0.0
      %250 = vmatprep.subr.mxu0 0.0
      %251 = vmatpush1.xpose.msra.mxu0 0.0
      %252 = vmatprep.subr.mxu0 0.0
      %253 = vmatpush1.xpose.msra.mxu0 0.0
      %254 = vmatprep.subr.mxu0 0.0
      %255 = vmatpush1.xpose.msra.mxu0 0.0
      %256 = vmatprep.subr.mxu0 0.0
      %257 = vmatpush1.xpose.msra.mxu0 0.0
      %258 = vmatprep.subr.mxu0 0.0
      %259 = vmatpush1.xpose.msra.mxu0 0.0
      %260 = vmatprep.subr.mxu0 0.0
      %261 = vmatpush1.xpose.msra.mxu0 0.0
      %262 = vmatprep.subr.mxu0 0.0
      %263 = vmatpush1.xpose.msra.mxu0 0.0
      %264 = vmatprep.subr.mxu0 0.0
      %265 = vmatpush1.xpose.msra.mxu0 0.0
      %266 = vmatprep.subr.mxu0 0.0
      %267 = vmatpush1.xpose.msra.mxu0 0.0
      %268 = vmatprep.subr.mxu0 0.0
      %269 = vmatpush1.xpose.msra.mxu0 0.0
      %270 = vmatprep.subr.mxu0 0.0
      %271 = vmatpush1.xpose.msra.mxu0 0.0
      %272 = vmatprep.subr.mxu0 0.0
      %273 = vmatpush1.xpose.msra.mxu0 0.0
      %274 = vmatprep.subr.mxu0 0.0
      %275 = vmatpush1.xpose.msra.mxu0 0.0
      %276 = vmatprep.mubr.f32.mxu0 0.0
      %277 = vmatmul.mubr.f32.gmra.mrb[0].mxu0 %v207
      %v278 = vpop.f32.mrb[0].mxu0
      %v279 = vadd.f32 0.0, %v278
      %v280 = vpop.f32.mrb[0].mxu0
      %281 = vdwg.mxu0
      %v283 = vsel %vm129, %v115, 0
      %v286 = vsel %vm129, %v123, 0
      %288 = vmatprep.subr.mxu0 0.0
      %289 = vmatpush1.xpose.msra.mxu0 %v286
      %290 = vmatprep.subr.mxu0 0.0
      %291 = vmatpush1.xpose.msra.mxu0 0.0
      %292 = vmatprep.subr.mxu0 0.0
      %293 = vmatpush1.xpose.msra.mxu0 0.0
      %294 = vmatprep.subr.mxu0 0.0
      %295 = vmatpush1.xpose.msra.mxu0 0.0
      %296 = vmatprep.subr.mxu0 0.0
      %297 = vmatpush1.xpose.msra.mxu0 0.0
      %298 = vmatprep.subr.mxu0 0.0
      %299 = vmatpush1.xpose.msra.mxu0 0.0
      %300 = vmatprep.subr.mxu0 0.0
      %301 = vmatpush1.xpose.msra.mxu0 0.0
      %302 = vmatprep.subr.mxu0 0.0
      %303 = vmatpush1.xpose.msra.mxu0 0.0
      %304 = vmatprep.subr.mxu0 0.0
      %305 = vmatpush1.xpose.msra.mxu0 0.0
      %306 = vmatprep.subr.mxu0 0.0
      %307 = vmatpush1.xpose.msra.mxu0 0.0
      %308 = vmatprep.subr.mxu0 0.0
      %309 = vmatpush1.xpose.msra.mxu0 0.0
      %310 = vmatprep.subr.mxu0 0.0
      %311 = vmatpush1.xpose.msra.mxu0 0.0
      %312 = vmatprep.subr.mxu0 0.0
      %313 = vmatpush1.xpose.msra.mxu0 0.0
      %314 = vmatprep.subr.mxu0 0.0
      %315 = vmatpush1.xpose.msra.mxu0 0.0
      %316 = vmatprep.subr.mxu0 0.0
      %317 = vmatpush1.xpose.msra.mxu0 0.0
      %318 = vmatprep.subr.mxu0 0.0
      %319 = vmatpush1.xpose.msra.mxu0 0.0
      %320 = vmatprep.subr.mxu0 0.0
      %321 = vmatpush1.xpose.msra.mxu0 0.0
      %322 = vmatprep.subr.mxu0 0.0
      %323 = vmatpush1.xpose.msra.mxu0 0.0
      %324 = vmatprep.subr.mxu0 0.0
      %325 = vmatpush1.xpose.msra.mxu0 0.0
      %326 = vmatprep.subr.mxu0 0.0
      %327 = vmatpush1.xpose.msra.mxu0 0.0
      %328 = vmatprep.subr.mxu0 0.0
      %329 = vmatpush1.xpose.msra.mxu0 0.0
      %330 = vmatprep.subr.mxu0 0.0
      %331 = vmatpush1.xpose.msra.mxu0 0.0
      %332 = vmatprep.subr.mxu0 0.0
      %333 = vmatpush1.xpose.msra.mxu0 0.0
      %334 = vmatprep.subr.mxu0 0.0
      %335 = vmatpush1.xpose.msra.mxu0 0.0
      %336 = vmatprep.subr.mxu0 0.0
      %337 = vmatpush1.xpose.msra.mxu0 0.0
      %338 = vmatprep.subr.mxu0 0.0
      %339 = vmatpush1.xpose.msra.mxu0 0.0
      %340 = vmatprep.subr.mxu0 0.0
      %341 = vmatpush1.xpose.msra.mxu0 0.0
      %342 = vmatprep.subr.mxu0 0.0
      %343 = vmatpush1.xpose.msra.mxu0 0.0
      %344 = vmatprep.subr.mxu0 0.0
      %345 = vmatpush1.xpose.msra.mxu0 0.0
      %346 = vmatprep.subr.mxu0 0.0
      %347 = vmatpush1.xpose.msra.mxu0 0.0
      %348 = vmatprep.subr.mxu0 0.0
      %349 = vmatpush1.xpose.msra.mxu0 0.0
      %350 = vmatprep.subr.mxu0 0.0
      %351 = vmatpush1.xpose.msra.mxu0 0.0
      %352 = vmatprep.mubr.f32.mxu0 0.0
      %353 = vmatmul.mubr.f32.gmra.mrb[0].mxu0 %v283
      %v354 = vpop.f32.mrb[0].mxu0
      %v355 = vadd.f32 0.0, %v354
      %v356 = vpop.f32.mrb[0].mxu0
      %357 = vdwg.mxu0
      %v359 = vsel %vm129, %v116, 0
      %v362 = vsel %vm129, %v124, 0
      %364 = vmatprep.subr.mxu0 0.0
      %365 = vmatpush1.xpose.msra.mxu0 %v362
      %366 = vmatprep.subr.mxu0 0.0
      %367 = vmatpush1.xpose.msra.mxu0 0.0
      %368 = vmatprep.subr.mxu0 0.0
      %369 = vmatpush1.xpose.msra.mxu0 0.0
      %370 = vmatprep.subr.mxu0 0.0
      %371 = vmatpush1.xpose.msra.mxu0 0.0
      %372 = vmatprep.subr.mxu0 0.0
      %373 = vmatpush1.xpose.msra.mxu0 0.0
      %374 = vmatprep.subr.mxu0 0.0
      %375 = vmatpush1.xpose.msra.mxu0 0.0
      %376 = vmatprep.subr.mxu0 0.0
      %377 = vmatpush1.xpose.msra.mxu0 0.0
      %378 = vmatprep.subr.mxu0 0.0
      %379 = vmatpush1.xpose.msra.mxu0 0.0
      %380 = vmatprep.subr.mxu0 0.0
      %381 = vmatpush1.xpose.msra.mxu0 0.0
      %382 = vmatprep.subr.mxu0 0.0
      %383 = vmatpush1.xpose.msra.mxu0 0.0
      %384 = vmatprep.subr.mxu0 0.0
      %385 = vmatpush1.xpose.msra.mxu0 0.0
      %386 = vmatprep.subr.mxu0 0.0
      %387 = vmatpush1.xpose.msra.mxu0 0.0
      %388 = vmatprep.subr.mxu0 0.0
      %389 = vmatpush1.xpose.msra.mxu0 0.0
      %390 = vmatprep.subr.mxu0 0.0
      %391 = vmatpush1.xpose.msra.mxu0 0.0
      %392 = vmatprep.subr.mxu0 0.0
      %393 = vmatpush1.xpose.msra.mxu0 0.0
      %394 = vmatprep.subr.mxu0 0.0
      %395 = vmatpush1.xpose.msra.mxu0 0.0
      %396 = vmatprep.subr.mxu0 0.0
      %397 = vmatpush1.xpose.msra.mxu0 0.0
      %398 = vmatprep.subr.mxu0 0.0
      %399 = vmatpush1.xpose.msra.mxu0 0.0
      %400 = vmatprep.subr.mxu0 0.0
      %401 = vmatpush1.xpose.msra.mxu0 0.0
      %402 = vmatprep.subr.mxu0 0.0
      %403 = vmatpush1.xpose.msra.mxu0 0.0
      %404 = vmatprep.subr.mxu0 0.0
      %405 = vmatpush1.xpose.msra.mxu0 0.0
      %406 = vmatprep.subr.mxu0 0.0
      %407 = vmatpush1.xpose.msra.mxu0 0.0
      %408 = vmatprep.subr.mxu0 0.0
      %409 = vmatpush1.xpose.msra.mxu0 0.0
      %410 = vmatprep.subr.mxu0 0.0
      %411 = vmatpush1.xpose.msra.mxu0 0.0
      %412 = vmatprep.subr.mxu0 0.0
      %413 = vmatpush1.xpose.msra.mxu0 0.0
      %414 = vmatprep.subr.mxu0 0.0
      %415 = vmatpush1.xpose.msra.mxu0 0.0
      %416 = vmatprep.subr.mxu0 0.0
      %417 = vmatpush1.xpose.msra.mxu0 0.0
      %418 = vmatprep.subr.mxu0 0.0
      %419 = vmatpush1.xpose.msra.mxu0 0.0
      %420 = vmatprep.subr.mxu0 0.0
      %421 = vmatpush1.xpose.msra.mxu0 0.0
      %422 = vmatprep.subr.mxu0 0.0
      %423 = vmatpush1.xpose.msra.mxu0 0.0
      %424 = vmatprep.subr.mxu0 0.0
      %425 = vmatpush1.xpose.msra.mxu0 0.0
      %426 = vmatprep.subr.mxu0 0.0
      %427 = vmatpush1.xpose.msra.mxu0 0.0
      %428 = vmatprep.mubr.f32.mxu0 0.0
      %429 = vmatmul.mubr.f32.gmra.mrb[0].mxu0 %v359
      %v430 = vpop.f32.mrb[0].mxu0
      %v431 = vadd.f32 0.0, %v430
      %v432 = vpop.f32.mrb[0].mxu0
      %433 = vdwg.mxu0
      %v435 = vsel %vm129, %v117, 0
      %v438 = vsel %vm129, %v125, 0
      %440 = vmatprep.subr.mxu0 0.0
      %441 = vmatpush1.xpose.msra.mxu0 %v438
      %442 = vmatprep.subr.mxu0 0.0
      %443 = vmatpush1.xpose.msra.mxu0 0.0
      %444 = vmatprep.subr.mxu0 0.0
      %445 = vmatpush1.xpose.msra.mxu0 0.0
      %446 = vmatprep.subr.mxu0 0.0
      %447 = vmatpush1.xpose.msra.mxu0 0.0
      %448 = vmatprep.subr.mxu0 0.0
      %449 = vmatpush1.xpose.msra.mxu0 0.0
      %450 = vmatprep.subr.mxu0 0.0
      %451 = vmatpush1.xpose.msra.mxu0 0.0
      %452 = vmatprep.subr.mxu0 0.0
      %453 = vmatpush1.xpose.msra.mxu0 0.0
      %454 = vmatprep.subr.mxu0 0.0
      %455 = vmatpush1.xpose.msra.mxu0 0.0
      %456 = vmatprep.subr.mxu0 0.0
      %457 = vmatpush1.xpose.msra.mxu0 0.0
      %458 = vmatprep.subr.mxu0 0.0
      %459 = vmatpush1.xpose.msra.mxu0 0.0
      %460 = vmatprep.subr.mxu0 0.0
      %461 = vmatpush1.xpose.msra.mxu0 0.0
      %462 = vmatprep.subr.mxu0 0.0
      %463 = vmatpush1.xpose.msra.mxu0 0.0
      %464 = vmatprep.subr.mxu0 0.0
      %465 = vmatpush1.xpose.msra.mxu0 0.0
      %466 = vmatprep.subr.mxu0 0.0
      %467 = vmatpush1.xpose.msra.mxu0 0.0
      %468 = vmatprep.subr.mxu0 0.0
      %469 = vmatpush1.xpose.msra.mxu0 0.0
      %470 = vmatprep.subr.mxu0 0.0
      %471 = vmatpush1.xpose.msra.mxu0 0.0
      %472 = vmatprep.subr.mxu0 0.0
      %473 = vmatpush1.xpose.msra.mxu0 0.0
      %474 = vmatprep.subr.mxu0 0.0
      %475 = vmatpush1.xpose.msra.mxu0 0.0
      %476 = vmatprep.subr.mxu0 0.0
      %477 = vmatpush1.xpose.msra.mxu0 0.0
      %478 = vmatprep.subr.mxu0 0.0
      %479 = vmatpush1.xpose.msra.mxu0 0.0
      %480 = vmatprep.subr.mxu0 0.0
      %481 = vmatpush1.xpose.msra.mxu0 0.0
      %482 = vmatprep.subr.mxu0 0.0
      %483 = vmatpush1.xpose.msra.mxu0 0.0
      %484 = vmatprep.subr.mxu0 0.0
      %485 = vmatpush1.xpose.msra.mxu0 0.0
      %486 = vmatprep.subr.mxu0 0.0
      %487 = vmatpush1.xpose.msra.mxu0 0.0
      %488 = vmatprep.subr.mxu0 0.0
      %489 = vmatpush1.xpose.msra.mxu0 0.0
      %490 = vmatprep.subr.mxu0 0.0
      %491 = vmatpush1.xpose.msra.mxu0 0.0
      %492 = vmatprep.subr.mxu0 0.0
      %493 = vmatpush1.xpose.msra.mxu0 0.0
      %494 = vmatprep.subr.mxu0 0.0
      %495 = vmatpush1.xpose.msra.mxu0 0.0
      %496 = vmatprep.subr.mxu0 0.0
      %497 = vmatpush1.xpose.msra.mxu0 0.0
      %498 = vmatprep.subr.mxu0 0.0
      %499 = vmatpush1.xpose.msra.mxu0 0.0
      %500 = vmatprep.subr.mxu0 0.0
      %501 = vmatpush1.xpose.msra.mxu0 0.0
      %502 = vmatprep.subr.mxu0 0.0
      %503 = vmatpush1.xpose.msra.mxu0 0.0
      %504 = vmatprep.mubr.f32.mxu0 0.0
      %505 = vmatmul.mubr.f32.gmra.mrb[0].mxu0 %v435
      %v506 = vpop.f32.mrb[0].mxu0
      %v507 = vadd.f32 0.0, %v506
      %v508 = vpop.f32.mrb[0].mxu0
      %509 = vdwg.mxu0
      %v511 = vsel %vm129, %v118, 0
      %v514 = vsel %vm129, %v126, 0
      %516 = vmatprep.subr.mxu0 0.0
      %517 = vmatpush1.xpose.msra.mxu0 %v514
      %518 = vmatprep.subr.mxu0 0.0
      %519 = vmatpush1.xpose.msra.mxu0 0.0
      %520 = vmatprep.subr.mxu0 0.0
      %521 = vmatpush1.xpose.msra.mxu0 0.0
      %522 = vmatprep.subr.mxu0 0.0
      %523 = vmatpush1.xpose.msra.mxu0 0.0
      %524 = vmatprep.subr.mxu0 0.0
      %525 = vmatpush1.xpose.msra.mxu0 0.0
      %526 = vmatprep.subr.mxu0 0.0
      %527 = vmatpush1.xpose.msra.mxu0 0.0
      %528 = vmatprep.subr.mxu0 0.0
      %529 = vmatpush1.xpose.msra.mxu0 0.0
      %530 = vmatprep.subr.mxu0 0.0
      %531 = vmatpush1.xpose.msra.mxu0 0.0
      %532 = vmatprep.subr.mxu0 0.0
      %533 = vmatpush1.xpose.msra.mxu0 0.0
      %534 = vmatprep.subr.mxu0 0.0
      %535 = vmatpush1.xpose.msra.mxu0 0.0
      %536 = vmatprep.subr.mxu0 0.0
      %537 = vmatpush1.xpose.msra.mxu0 0.0
      %538 = vmatprep.subr.mxu0 0.0
      %539 = vmatpush1.xpose.msra.mxu0 0.0
      %540 = vmatprep.subr.mxu0 0.0
      %541 = vmatpush1.xpose.msra.mxu0 0.0
      %542 = vmatprep.subr.mxu0 0.0
      %543 = vmatpush1.xpose.msra.mxu0 0.0
      %544 = vmatprep.subr.mxu0 0.0
      %545 = vmatpush1.xpose.msra.mxu0 0.0
      %546 = vmatprep.subr.mxu0 0.0
      %547 = vmatpush1.xpose.msra.mxu0 0.0
      %548 = vmatprep.subr.mxu0 0.0
      %549 = vmatpush1.xpose.msra.mxu0 0.0
      %550 = vmatprep.subr.mxu0 0.0
      %551 = vmatpush1.xpose.msra.mxu0 0.0
      %552 = vmatprep.subr.mxu0 0.0
      %553 = vmatpush1.xpose.msra.mxu0 0.0
      %554 = vmatprep.subr.mxu0 0.0
      %555 = vmatpush1.xpose.msra.mxu0 0.0
      %556 = vmatprep.subr.mxu0 0.0
      %557 = vmatpush1.xpose.msra.mxu0 0.0
      %558 = vmatprep.subr.mxu0 0.0
      %559 = vmatpush1.xpose.msra.mxu0 0.0
      %560 = vmatprep.subr.mxu0 0.0
      %561 = vmatpush1.xpose.msra.mxu0 0.0
      %562 = vmatprep.subr.mxu0 0.0
      %563 = vmatpush1.xpose.msra.mxu0 0.0
      %564 = vmatprep.subr.mxu0 0.0
      %565 = vmatpush1.xpose.msra.mxu0 0.0
      %566 = vmatprep.subr.mxu0 0.0
      %567 = vmatpush1.xpose.msra.mxu0 0.0
      %568 = vmatprep.subr.mxu0 0.0
      %569 = vmatpush1.xpose.msra.mxu0 0.0
      %570 = vmatprep.subr.mxu0 0.0
      %571 = vmatpush1.xpose.msra.mxu0 0.0
      %572 = vmatprep.subr.mxu0 0.0
      %573 = vmatpush1.xpose.msra.mxu0 0.0
      %574 = vmatprep.subr.mxu0 0.0
      %575 = vmatpush1.xpose.msra.mxu0 0.0
      %576 = vmatprep.subr.mxu0 0.0
      %577 = vmatpush1.xpose.msra.mxu0 0.0
      %578 = vmatprep.subr.mxu0 0.0
      %579 = vmatpush1.xpose.msra.mxu0 0.0
      %580 = vmatprep.mubr.f32.mxu0 0.0
      %581 = vmatmul.mubr.f32.gmra.mrb[0].mxu0 %v511
      %v582 = vpop.f32.mrb[0].mxu0
      %v583 = vadd.f32 0.0, %v582
      %v584 = vpop.f32.mrb[0].mxu0
      %585 = vdwg.mxu0
      %v587 = vsel %vm129, %v119, 0
      %v590 = vsel %vm129, %v127, 0
      %592 = vmatprep.subr.mxu0 0.0
      %593 = vmatpush1.xpose.msra.mxu0 %v590
      %594 = vmatprep.subr.mxu0 0.0
      %595 = vmatpush1.xpose.msra.mxu0 0.0
      %596 = vmatprep.subr.mxu0 0.0
      %597 = vmatpush1.xpose.msra.mxu0 0.0
      %598 = vmatprep.subr.mxu0 0.0
      %599 = vmatpush1.xpose.msra.mxu0 0.0
      %600 = vmatprep.subr.mxu0 0.0
      %601 = vmatpush1.xpose.msra.mxu0 0.0
      %602 = vmatprep.subr.mxu0 0.0
      %603 = vmatpush1.xpose.msra.mxu0 0.0
      %604 = vmatprep.subr.mxu0 0.0
      %605 = vmatpush1.xpose.msra.mxu0 0.0
      %606 = vmatprep.subr.mxu0 0.0
      %607 = vmatpush1.xpose.msra.mxu0 0.0
      %608 = vmatprep.subr.mxu0 0.0
      %609 = vmatpush1.xpose.msra.mxu0 0.0
      %610 = vmatprep.subr.mxu0 0.0
      %611 = vmatpush1.xpose.msra.mxu0 0.0
      %612 = vmatprep.subr.mxu0 0.0
      %613 = vmatpush1.xpose.msra.mxu0 0.0
      %614 = vmatprep.subr.mxu0 0.0
      %615 = vmatpush1.xpose.msra.mxu0 0.0
      %616 = vmatprep.subr.mxu0 0.0
      %617 = vmatpush1.xpose.msra.mxu0 0.0
      %618 = vmatprep.subr.mxu0 0.0
      %619 = vmatpush1.xpose.msra.mxu0 0.0
      %620 = vmatprep.subr.mxu0 0.0
      %621 = vmatpush1.xpose.msra.mxu0 0.0
      %622 = vmatprep.subr.mxu0 0.0
      %623 = vmatpush1.xpose.msra.mxu0 0.0
      %624 = vmatprep.subr.mxu0 0.0
      %625 = vmatpush1.xpose.msra.mxu0 0.0
      %626 = vmatprep.subr.mxu0 0.0
      %627 = vmatpush1.xpose.msra.mxu0 0.0
      %628 = vmatprep.subr.mxu0 0.0
      %629 = vmatpush1.xpose.msra.mxu0 0.0
      %630 = vmatprep.subr.mxu0 0.0
      %631 = vmatpush1.xpose.msra.mxu0 0.0
      %632 = vmatprep.subr.mxu0 0.0
      %633 = vmatpush1.xpose.msra.mxu0 0.0
      %634 = vmatprep.subr.mxu0 0.0
      %635 = vmatpush1.xpose.msra.mxu0 0.0
      %636 = vmatprep.subr.mxu0 0.0
      %637 = vmatpush1.xpose.msra.mxu0 0.0
      %638 = vmatprep.subr.mxu0 0.0
      %639 = vmatpush1.xpose.msra.mxu0 0.0
      %640 = vmatprep.subr.mxu0 0.0
      %641 = vmatpush1.xpose.msra.mxu0 0.0
      %642 = vmatprep.subr.mxu0 0.0
      %643 = vmatpush1.xpose.msra.mxu0 0.0
      %644 = vmatprep.subr.mxu0 0.0
      %645 = vmatpush1.xpose.msra.mxu0 0.0
      %646 = vmatprep.subr.mxu0 0.0
      %647 = vmatpush1.xpose.msra.mxu0 0.0
      %648 = vmatprep.subr.mxu0 0.0
      %649 = vmatpush1.xpose.msra.mxu0 0.0
      %650 = vmatprep.subr.mxu0 0.0
      %651 = vmatpush1.xpose.msra.mxu0 0.0
      %652 = vmatprep.subr.mxu0 0.0
      %653 = vmatpush1.xpose.msra.mxu0 0.0
      %654 = vmatprep.subr.mxu0 0.0
      %655 = vmatpush1.xpose.msra.mxu0 0.0
      %656 = vmatprep.mubr.f32.mxu0 0.0
      %657 = vmatmul.mubr.f32.gmra.mrb[0].mxu0 %v587
      %v658 = vpop.f32.mrb[0].mxu0
      %v659 = vadd.f32 0.0, %v658
      %v660 = vpop.f32.mrb[0].mxu0
      %661 = vdwg.mxu0
      %v663 = vsel %vm129, %v120, 0
      %v666 = vsel %vm129, %v128, 0
      %668 = vmatprep.subr.mxu0 0.0
      %669 = vmatpush1.xpose.msra.mxu0 %v666
      %670 = vmatprep.subr.mxu0 0.0
      %671 = vmatpush1.xpose.msra.mxu0 0.0
      %672 = vmatprep.subr.mxu0 0.0
      %673 = vmatpush1.xpose.msra.mxu0 0.0
      %674 = vmatprep.subr.mxu0 0.0
      %675 = vmatpush1.xpose.msra.mxu0 0.0
      %676 = vmatprep.subr.mxu0 0.0
      %677 = vmatpush1.xpose.msra.mxu0 0.0
      %678 = vmatprep.subr.mxu0 0.0
      %679 = vmatpush1.xpose.msra.mxu0 0.0
      %680 = vmatprep.subr.mxu0 0.0
      %681 = vmatpush1.xpose.msra.mxu0 0.0
      %682 = vmatprep.subr.mxu0 0.0
      %683 = vmatpush1.xpose.msra.mxu0 0.0
      %684 = vmatprep.subr.mxu0 0.0
      %685 = vmatpush1.xpose.msra.mxu0 0.0
      %686 = vmatprep.subr.mxu0 0.0
      %687 = vmatpush1.xpose.msra.mxu0 0.0
      %688 = vmatprep.subr.mxu0 0.0
      %689 = vmatpush1.xpose.msra.mxu0 0.0
      %690 = vmatprep.subr.mxu0 0.0
      %691 = vmatpush1.xpose.msra.mxu0 0.0
      %692 = vmatprep.subr.mxu0 0.0
      %693 = vmatpush1.xpose.msra.mxu0 0.0
      %694 = vmatprep.subr.mxu0 0.0
      %695 = vmatpush1.xpose.msra.mxu0 0.0
      %696 = vmatprep.subr.mxu0 0.0
      %697 = vmatpush1.xpose.msra.mxu0 0.0
      %698 = vmatprep.subr.mxu0 0.0
      %699 = vmatpush1.xpose.msra.mxu0 0.0
      %700 = vmatprep.subr.mxu0 0.0
      %701 = vmatpush1.xpose.msra.mxu0 0.0
      %702 = vmatprep.subr.mxu0 0.0
      %703 = vmatpush1.xpose.msra.mxu0 0.0
      %704 = vmatprep.subr.mxu0 0.0
      %705 = vmatpush1.xpose.msra.mxu0 0.0
      %706 = vmatprep.subr.mxu0 0.0
      %707 = vmatpush1.xpose.msra.mxu0 0.0
      %708 = vmatprep.subr.mxu0 0.0
      %709 = vmatpush1.xpose.msra.mxu0 0.0
      %710 = vmatprep.subr.mxu0 0.0
      %711 = vmatpush1.xpose.msra.mxu0 0.0
      %712 = vmatprep.subr.mxu0 0.0
      %713 = vmatpush1.xpose.msra.mxu0 0.0
      %714 = vmatprep.subr.mxu0 0.0
      %715 = vmatpush1.xpose.msra.mxu0 0.0
      %716 = vmatprep.subr.mxu0 0.0
      %717 = vmatpush1.xpose.msra.mxu0 0.0
      %718 = vmatprep.subr.mxu0 0.0
      %719 = vmatpush1.xpose.msra.mxu0 0.0
      %720 = vmatprep.subr.mxu0 0.0
      %721 = vmatpush1.xpose.msra.mxu0 0.0
      %722 = vmatprep.subr.mxu0 0.0
      %723 = vmatpush1.xpose.msra.mxu0 0.0
      %724 = vmatprep.subr.mxu0 0.0
      %725 = vmatpush1.xpose.msra.mxu0 0.0
      %726 = vmatprep.subr.mxu0 0.0
      %727 = vmatpush1.xpose.msra.mxu0 0.0
      %728 = vmatprep.subr.mxu0 0.0
      %729 = vmatpush1.xpose.msra.mxu0 0.0
      %730 = vmatprep.subr.mxu0 0.0
      %731 = vmatpush1.xpose.msra.mxu0 0.0
      %732 = vmatprep.mubr.f32.mxu0 0.0
      %733 = vmatmul.mubr.f32.gmra.mrb[0].mxu0 %v663
      %v734 = vpop.f32.mrb[0].mxu0
      %v735 = vadd.f32 0.0, %v734
      %v736 = vpop.f32.mrb[0].mxu0
      %737 = vdwg.mxu0
      %v738 = vmul.f32 %v203, 0.17677669
      %v739 = vmul.f32 %v279, 0.17677669
      %v740 = vmul.f32 %v355, 0.17677669
      %v741 = vmul.f32 %v431, 0.17677669
      %v742 = vmul.f32 %v507, 0.17677669
      %v743 = vmul.f32 %v583, 0.17677669
      %v744 = vmul.f32 %v659, 0.17677669
      %v745 = vmul.f32 %v735, 0.17677669
      %v746 = vlaneseq
      %v747 = vand.u32 %v746, 127
      %v748 = vstv %s108
      %v749 = vadd.s32 %v748, %v747
      %v750 = vstv %s77
      %vm751 = vcmp.lt.s32.totalorder %v749, %v750
      %v752 = vsel %vm751, 1, 0
      %vm753 = vcmp.eq.s32.totalorder %v752, 1
      %v754 = vsel %vm753, %v738, -1e+30
      %v755 = vsel %vm753, %v739, -1e+30
      %v756 = vsel %vm753, %v740, -1e+30
      %v757 = vsel %vm753, %v741, -1e+30
      %v758 = vsel %vm753, %v742, -1e+30
      %v759 = vsel %vm753, %v743, -1e+30
      %v760 = vsel %vm753, %v744, -1e+30
      %v761 = vsel %vm753, %v745, -1e+30
      %v762 = vld [vmem:[#allocation2] sm:$0x1]
      %v763 = vld [vmem:[#allocation2 + $0x1] sm:$0x1]
      %v764 = vld [vmem:[#allocation2 + $0x2] sm:$0x1]
      %v765 = vld [vmem:[#allocation2 + $0x3] sm:$0x1]
      %v766 = vld [vmem:[#allocation2 + $0x4] sm:$0x1]
      %v767 = vld [vmem:[#allocation2 + $0x5] sm:$0x1]
      %v768 = vld [vmem:[#allocation2 + $0x6] sm:$0x1]
      %v769 = vld [vmem:[#allocation2 + $0x7] sm:$0x1]
      %vm770 = vcmask 57344
      %v771 = vsel %vm770, %v754, -inf
      %772 = vmax.xlane.f32.xlu0 %v771
      %v773 = vpop.xlane.xlu0 %772
      %v774 = vsel %vm770, %v755, -inf
      %775 = vmax.xlane.f32.xlu0 %v774
      %v776 = vpop.xlane.xlu0 %775
      %v777 = vsel %vm770, %v756, -inf
      %778 = vmax.xlane.f32.xlu0 %v777
      %v779 = vpop.xlane.xlu0 %778
      %v780 = vsel %vm770, %v757, -inf
      %781 = vmax.xlane.f32.xlu0 %v780
      %v782 = vpop.xlane.xlu0 %781
      %v783 = vsel %vm770, %v758, -inf
      %784 = vmax.xlane.f32.xlu0 %v783
      %v785 = vpop.xlane.xlu0 %784
      %v786 = vsel %vm770, %v759, -inf
      %787 = vmax.xlane.f32.xlu0 %v786
      %v788 = vpop.xlane.xlu0 %787
      %v789 = vsel %vm770, %v760, -inf
      %790 = vmax.xlane.f32.xlu0 %v789
      %v791 = vpop.xlane.xlu0 %790
      %v792 = vsel %vm770, %v761, -inf
      %793 = vmax.xlane.f32.xlu0 %v792
      %v794 = vpop.xlane.xlu0 %793
      %v795 = vmax.f32 %v762, %v773
      %v796 = vmax.f32 %v763, %v776
      %v797 = vmax.f32 %v764, %v779
      %v798 = vmax.f32 %v765, %v782
      %v799 = vmax.f32 %v766, %v785
      %v800 = vmax.f32 %v767, %v788
      %v801 = vmax.f32 %v768, %v791
      %v802 = vmax.f32 %v769, %v794
      %v803 = vsub.f32 %v762, %v795
      %v804 = vsub.f32 %v763, %v796
      %v805 = vsub.f32 %v764, %v797
      %v806 = vsub.f32 %v765, %v798
      %v807 = vsub.f32 %v766, %v799
      %v808 = vsub.f32 %v767, %v800
      %v809 = vsub.f32 %v768, %v801
      %v810 = vsub.f32 %v769, %v802
      %v811 = vmul.f32 %v803, 1.442695
      %v812 = vpow.pop %v811
      %v813 = vmul.f32 %v804, 1.442695
      %v814 = vpow.pop %v813
      %v815 = vmul.f32 %v805, 1.442695
      %v816 = vpow.pop %v815
      %v817 = vmul.f32 %v806, 1.442695
      %v818 = vpow.pop %v817
      %v819 = vmul.f32 %v807, 1.442695
      %v820 = vpow.pop %v819
      %v821 = vmul.f32 %v808, 1.442695
      %v822 = vpow.pop %v821
      %v823 = vmul.f32 %v809, 1.442695
      %v824 = vpow.pop %v823
      %v825 = vmul.f32 %v810, 1.442695
      %v826 = vpow.pop %v825
      %828 = vset.pattern.permute.xlu0 0
      %829 = vperm.xlu0 %828, %v795
      %v830 = vpop.permute.xlu0 %829
      %v832 = vlaneseq
      %v833 = vshrl.u32 %v832, 7
      %v834 = vsub.s32 0, %v833
      %v835 = vrot.slane %v830, %v834
      %837 = vset.pattern.permute.xlu0 0
      %838 = vperm.xlu0 %837, %v796
      %v839 = vpop.permute.xlu0 %838
      %v841 = vlaneseq
      %v842 = vshrl.u32 %v841, 7
      %v843 = vsub.s32 0, %v842
      %v844 = vrot.slane %v839, %v843
      %846 = vset.pattern.permute.xlu0 0
      %847 = vperm.xlu0 %846, %v797
      %v848 = vpop.permute.xlu0 %847
      %v850 = vlaneseq
      %v851 = vshrl.u32 %v850, 7
      %v852 = vsub.s32 0, %v851
      %v853 = vrot.slane %v848, %v852
      %855 = vset.pattern.permute.xlu0 0
      %856 = vperm.xlu0 %855, %v798
      %v857 = vpop.permute.xlu0 %856
      %v859 = vlaneseq
      %v860 = vshrl.u32 %v859, 7
      %v861 = vsub.s32 0, %v860
      %v862 = vrot.slane %v857, %v861
      %864 = vset.pattern.permute.xlu0 0
      %865 = vperm.xlu0 %864, %v799
      %v866 = vpop.permute.xlu0 %865
      %v868 = vlaneseq
      %v869 = vshrl.u32 %v868, 7
      %v870 = vsub.s32 0, %v869
      %v871 = vrot.slane %v866, %v870
      %873 = vset.pattern.permute.xlu0 0
      %874 = vperm.xlu0 %873, %v800
      %v875 = vpop.permute.xlu0 %874
      %v877 = vlaneseq
      %v878 = vshrl.u32 %v877, 7
      %v879 = vsub.s32 0, %v878
      %v880 = vrot.slane %v875, %v879
      %882 = vset.pattern.permute.xlu0 0
      %883 = vperm.xlu0 %882, %v801
      %v884 = vpop.permute.xlu0 %883
      %v886 = vlaneseq
      %v887 = vshrl.u32 %v886, 7
      %v888 = vsub.s32 0, %v887
      %v889 = vrot.slane %v884, %v888
      %891 = vset.pattern.permute.xlu0 0
      %892 = vperm.xlu0 %891, %v802
      %v893 = vpop.permute.xlu0 %892
      %v895 = vlaneseq
      %v896 = vshrl.u32 %v895, 7
      %v897 = vsub.s32 0, %v896
      %v898 = vrot.slane %v893, %v897
      %v899 = vsub.f32 %v754, %v835
      %v900 = vsub.f32 %v755, %v844
      %v901 = vsub.f32 %v756, %v853
      %v902 = vsub.f32 %v757, %v862
      %v903 = vsub.f32 %v758, %v871
      %v904 = vsub.f32 %v759, %v880
      %v905 = vsub.f32 %v760, %v889
      %v906 = vsub.f32 %v761, %v898
      %v907 = vmul.f32 %v899, 1.442695
      %v908 = vpow.pop %v907
      %v909 = vmul.f32 %v900, 1.442695
      %v910 = vpow.pop %v909
      %v911 = vmul.f32 %v901, 1.442695
      %v912 = vpow.pop %v911
      %v913 = vmul.f32 %v902, 1.442695
      %v914 = vpow.pop %v913
      %v915 = vmul.f32 %v903, 1.442695
      %v916 = vpow.pop %v915
      %v917 = vmul.f32 %v904, 1.442695
      %v918 = vpow.pop %v917
      %v919 = vmul.f32 %v905, 1.442695
      %v920 = vpow.pop %v919
      %v921 = vmul.f32 %v906, 1.442695
      %v922 = vpow.pop %v921
      %v923 = vld [vmem:[#allocation3] sm:$0x1]
      %v924 = vld [vmem:[#allocation3 + $0x1] sm:$0x1]
      %v925 = vld [vmem:[#allocation3 + $0x2] sm:$0x1]
      %v926 = vld [vmem:[#allocation3 + $0x3] sm:$0x1]
      %v927 = vld [vmem:[#allocation3 + $0x4] sm:$0x1]
      %v928 = vld [vmem:[#allocation3 + $0x5] sm:$0x1]
      %v929 = vld [vmem:[#allocation3 + $0x6] sm:$0x1]
      %v930 = vld [vmem:[#allocation3 + $0x7] sm:$0x1]
      %v931 = vmul.f32 %v812, %v923
      %v932 = vmul.f32 %v814, %v924
      %v933 = vmul.f32 %v816, %v925
      %v934 = vmul.f32 %v818, %v926
      %v935 = vmul.f32 %v820, %v927
      %v936 = vmul.f32 %v822, %v928
      %v937 = vmul.f32 %v824, %v929
      %v938 = vmul.f32 %v826, %v930
      %v939 = vsel %vm770, %v908, 0.0
      %940 = vadd.xlane.f32.xlu0 %v939
      %v941 = vpop.xlane.xlu0 %940
      %v942 = vsel %vm770, %v910, 0.0
      %943 = vadd.xlane.f32.xlu0 %v942
      %v944 = vpop.xlane.xlu0 %943
      %v945 = vsel %vm770, %v912, 0.0
      %946 = vadd.xlane.f32.xlu0 %v945
      %v947 = vpop.xlane.xlu0 %946
      %v948 = vsel %vm770, %v914, 0.0
      %949 = vadd.xlane.f32.xlu0 %v948
      %v950 = vpop.xlane.xlu0 %949
      %v951 = vsel %vm770, %v916, 0.0
      %952 = vadd.xlane.f32.xlu0 %v951
      %v953 = vpop.xlane.xlu0 %952
      %v954 = vsel %vm770, %v918, 0.0
      %955 = vadd.xlane.f32.xlu0 %v954
      %v956 = vpop.xlane.xlu0 %955
      %v957 = vsel %vm770, %v920, 0.0
      %958 = vadd.xlane.f32.xlu0 %v957
      %v959 = vpop.xlane.xlu0 %958
      %v960 = vsel %vm770, %v922, 0.0
      %961 = vadd.xlane.f32.xlu0 %v960
      %v962 = vpop.xlane.xlu0 %961
      %v963 = vadd.f32 %v931, %v941
      %v964 = vadd.f32 %v932, %v944
      %v965 = vadd.f32 %v933, %v947
      %v966 = vadd.f32 %v934, %v950
      %v967 = vadd.f32 %v935, %v953
      %v968 = vadd.f32 %v936, %v956
      %v969 = vadd.f32 %v937, %v959
      %v970 = vadd.f32 %v938, %v962
      %vm971 = vcmask 0
      %972 = vst.msk [vmem:[#allocation3] sm:$0x1] %vm971, %v963
      %973 = vst.msk [vmem:[#allocation3 + $0x1] sm:$0x1] %vm971, %v964
      %974 = vst.msk [vmem:[#allocation3 + $0x2] sm:$0x1] %vm971, %v965
      %975 = vst.msk [vmem:[#allocation3 + $0x3] sm:$0x1] %vm971, %v966
      %976 = vst.msk [vmem:[#allocation3 + $0x4] sm:$0x1] %vm971, %v967
      %977 = vst.msk [vmem:[#allocation3 + $0x5] sm:$0x1] %vm971, %v968
      %978 = vst.msk [vmem:[#allocation3 + $0x6] sm:$0x1] %vm971, %v969
      %979 = vst.msk [vmem:[#allocation3 + $0x7] sm:$0x1] %vm971, %v970
      %v980 = vld [vmem:[#allocation4] sm:$0x1]
      %v981 = vld [vmem:[#allocation4 + $0x1] sm:$0x1]
      %v982 = vld [vmem:[#allocation4 + $0x2] sm:$0x1]
      %v983 = vld [vmem:[#allocation4 + $0x3] sm:$0x1]
      %v984 = vld [vmem:[#allocation4 + $0x4] sm:$0x1]
      %v985 = vld [vmem:[#allocation4 + $0x5] sm:$0x1]
      %v986 = vld [vmem:[#allocation4 + $0x6] sm:$0x1]
      %v987 = vld [vmem:[#allocation4 + $0x7] sm:$0x1]
      %989 = vset.pattern.permute.xlu0 0
      %990 = vperm.xlu0 %989, %v812
      %v991 = vpop.permute.xlu0 %990
      %v993 = vlaneseq
      %v994 = vshrl.u32 %v993, 7
      %v995 = vsub.s32 0, %v994
      %v996 = vrot.slane %v991, %v995
      %998 = vset.pattern.permute.xlu0 0
      %999 = vperm.xlu0 %998, %v814
      %v1000 = vpop.permute.xlu0 %999
      %v1002 = vlaneseq
      %v1003 = vshrl.u32 %v1002, 7
      %v1004 = vsub.s32 0, %v1003
      %v1005 = vrot.slane %v1000, %v1004
      %1007 = vset.pattern.permute.xlu0 0
      %1008 = vperm.xlu0 %1007, %v816
      %v1009 = vpop.permute.xlu0 %1008
      %v1011 = vlaneseq
      %v1012 = vshrl.u32 %v1011, 7
      %v1013 = vsub.s32 0, %v1012
      %v1014 = vrot.slane %v1009, %v1013
      %1016 = vset.pattern.permute.xlu0 0
      %1017 = vperm.xlu0 %1016, %v818
      %v1018 = vpop.permute.xlu0 %1017
      %v1020 = vlaneseq
      %v1021 = vshrl.u32 %v1020, 7
      %v1022 = vsub.s32 0, %v1021
      %v1023 = vrot.slane %v1018, %v1022
      %1025 = vset.pattern.permute.xlu0 0
      %1026 = vperm.xlu0 %1025, %v820
      %v1027 = vpop.permute.xlu0 %1026
      %v1029 = vlaneseq
      %v1030 = vshrl.u32 %v1029, 7
      %v1031 = vsub.s32 0, %v1030
      %v1032 = vrot.slane %v1027, %v1031
      %1034 = vset.pattern.permute.xlu0 0
      %1035 = vperm.xlu0 %1034, %v822
      %v1036 = vpop.permute.xlu0 %1035
      %v1038 = vlaneseq
      %v1039 = vshrl.u32 %v1038, 7
      %v1040 = vsub.s32 0, %v1039
      %v1041 = vrot.slane %v1036, %v1040
      %1043 = vset.pattern.permute.xlu0 0
      %1044 = vperm.xlu0 %1043, %v824
      %v1045 = vpop.permute.xlu0 %1044
      %v1047 = vlaneseq
      %v1048 = vshrl.u32 %v1047, 7
      %v1049 = vsub.s32 0, %v1048
      %v1050 = vrot.slane %v1045, %v1049
      %1052 = vset.pattern.permute.xlu0 0
      %1053 = vperm.xlu0 %1052, %v826
      %v1054 = vpop.permute.xlu0 %1053
      %v1056 = vlaneseq
      %v1057 = vshrl.u32 %v1056, 7
      %v1058 = vsub.s32 0, %v1057
      %v1059 = vrot.slane %v1054, %v1058
      %v1060 = vmul.f32 %v996, %v980
      %v1061 = vmul.f32 %v1005, %v981
      %v1062 = vmul.f32 %v1014, %v982
      %v1063 = vmul.f32 %v1023, %v983
      %v1064 = vmul.f32 %v1032, %v984
      %v1065 = vmul.f32 %v1041, %v985
      %v1066 = vmul.f32 %v1050, %v986
      %v1067 = vmul.f32 %v1059, %v987
      %v1068 = vld [vmem:[#allocation12] sm:$0xff]
      %v1069 = vld [vmem:[#allocation12 + $0x8] sm:$0xff]
      %v1070 = vld [vmem:[#allocation12 + $0x10] sm:$0xff]
      %v1071 = vld [vmem:[#allocation12 + $0x18] sm:$0xff]
      %v1072 = vld [vmem:[#allocation12 + $0x20] sm:$0xff]
      %v1073 = vld [vmem:[#allocation12 + $0x28] sm:$0xff]
      %v1074 = vld [vmem:[#allocation12 + $0x30] sm:$0xff]
      %v1075 = vld [vmem:[#allocation12 + $0x38] sm:$0xff]
      %vm1076 = vcmask 64512
      %v1078 = vsel %vm1076, %v908, 0
      %1080 = vmatprep.subr.mxu0 0.0
      %1081 = vmatpush1.msra.mxu0 %v1068
      %1082 = vmatprep.subr.mxu0 0.0
      %1083 = vmatpush1.msra.mxu0 0.0
      %1084 = vmatprep.subr.mxu0 0.0
      %1085 = vmatpush1.msra.mxu0 0.0
      %1086 = vmatprep.subr.mxu0 0.0
      %1087 = vmatpush1.msra.mxu0 0.0
      %1088 = vmatprep.subr.mxu0 0.0
      %1089 = vmatpush1.msra.mxu0 0.0
      %1090 = vmatprep.subr.mxu0 0.0
      %1091 = vmatpush1.msra.mxu0 0.0
      %1092 = vmatprep.subr.mxu0 0.0
      %1093 = vmatpush1.msra.mxu0 0.0
      %1094 = vmatprep.subr.mxu0 0.0
      %1095 = vmatpush1.msra.mxu0 0.0
      %1096 = vmatprep.subr.mxu0 0.0
      %1097 = vmatpush1.msra.mxu0 0.0
      %1098 = vmatprep.subr.mxu0 0.0
      %1099 = vmatpush1.msra.mxu0 0.0
      %1100 = vmatprep.subr.mxu0 0.0
      %1101 = vmatpush1.msra.mxu0 0.0
      %1102 = vmatprep.subr.mxu0 0.0
      %1103 = vmatpush1.msra.mxu0 0.0
      %1104 = vmatprep.subr.mxu0 0.0
      %1105 = vmatpush1.msra.mxu0 0.0
      %1106 = vmatprep.subr.mxu0 0.0
      %1107 = vmatpush1.msra.mxu0 0.0
      %1108 = vmatprep.subr.mxu0 0.0
      %1109 = vmatpush1.msra.mxu0 0.0
      %1110 = vmatprep.subr.mxu0 0.0
      %1111 = vmatpush1.msra.mxu0 0.0
      %1112 = vmatprep.subr.mxu0 0.0
      %1113 = vmatpush1.msra.mxu0 0.0
      %1114 = vmatprep.subr.mxu0 0.0
      %1115 = vmatpush1.msra.mxu0 0.0
      %1116 = vmatprep.subr.mxu0 0.0
      %1117 = vmatpush1.msra.mxu0 0.0
      %1118 = vmatprep.subr.mxu0 0.0
      %1119 = vmatpush1.msra.mxu0 0.0
      %1120 = vmatprep.subr.mxu0 0.0
      %1121 = vmatpush1.msra.mxu0 0.0
      %1122 = vmatprep.subr.mxu0 0.0
      %1123 = vmatpush1.msra.mxu0 0.0
      %1124 = vmatprep.subr.mxu0 0.0
      %1125 = vmatpush1.msra.mxu0 0.0
      %1126 = vmatprep.subr.mxu0 0.0
      %1127 = vmatpush1.msra.mxu0 0.0
      %1128 = vmatprep.subr.mxu0 0.0
      %1129 = vmatpush1.msra.mxu0 0.0
      %1130 = vmatprep.subr.mxu0 0.0
      %1131 = vmatpush1.msra.mxu0 0.0
      %1132 = vmatprep.subr.mxu0 0.0
      %1133 = vmatpush1.msra.mxu0 0.0
      %1134 = vmatprep.subr.mxu0 0.0
      %1135 = vmatpush1.msra.mxu0 0.0
      %1136 = vmatprep.subr.mxu0 0.0
      %1137 = vmatpush1.msra.mxu0 0.0
      %1138 = vmatprep.subr.mxu0 0.0
      %1139 = vmatpush1.msra.mxu0 0.0
      %1140 = vmatprep.subr.mxu0 0.0
      %1141 = vmatpush1.msra.mxu0 0.0
      %1142 = vmatprep.subr.mxu0 0.0
      %1143 = vmatpush1.msra.mxu0 0.0
      %1144 = vmatprep.mubr.f32.mxu0 0.0
      %1145 = vmatmul.mubr.f32.gmra.mrb[0].mxu0 %v1078
      %v1146 = vpop.f32.mrb[0].mxu0
      %v1147 = vadd.f32 0.0, %v1146
      %v1148 = vpop.f32.mrb[0].mxu0
      %1149 = vdwg.mxu0
      %v1151 = vsel %vm1076, %v910, 0
      %1153 = vmatprep.subr.mxu0 0.0
      %1154 = vmatpush1.msra.mxu0 %v1069
      %1155 = vmatprep.subr.mxu0 0.0
      %1156 = vmatpush1.msra.mxu0 0.0
      %1157 = vmatprep.subr.mxu0 0.0
      %1158 = vmatpush1.msra.mxu0 0.0
      %1159 = vmatprep.subr.mxu0 0.0
      %1160 = vmatpush1.msra.mxu0 0.0
      %1161 = vmatprep.subr.mxu0 0.0
      %1162 = vmatpush1.msra.mxu0 0.0
      %1163 = vmatprep.subr.mxu0 0.0
      %1164 = vmatpush1.msra.mxu0 0.0
      %1165 = vmatprep.subr.mxu0 0.0
      %1166 = vmatpush1.msra.mxu0 0.0
      %1167 = vmatprep.subr.mxu0 0.0
      %1168 = vmatpush1.msra.mxu0 0.0
      %1169 = vmatprep.subr.mxu0 0.0
      %1170 = vmatpush1.msra.mxu0 0.0
      %1171 = vmatprep.subr.mxu0 0.0
      %1172 = vmatpush1.msra.mxu0 0.0
      %1173 = vmatprep.subr.mxu0 0.0
      %1174 = vmatpush1.msra.mxu0 0.0
      %1175 = vmatprep.subr.mxu0 0.0
      %1176 = vmatpush1.msra.mxu0 0.0
      %1177 = vmatprep.subr.mxu0 0.0
      %1178 = vmatpush1.msra.mxu0 0.0
      %1179 = vmatprep.subr.mxu0 0.0
      %1180 = vmatpush1.msra.mxu0 0.0
      %1181 = vmatprep.subr.mxu0 0.0
      %1182 = vmatpush1.msra.mxu0 0.0
      %1183 = vmatprep.subr.mxu0 0.0
      %1184 = vmatpush1.msra.mxu0 0.0
      %1185 = vmatprep.subr.mxu0 0.0
      %1186 = vmatpush1.msra.mxu0 0.0
      %1187 = vmatprep.subr.mxu0 0.0
      %1188 = vmatpush1.msra.mxu0 0.0
      %1189 = vmatprep.subr.mxu0 0.0
      %1190 = vmatpush1.msra.mxu0 0.0
      %1191 = vmatprep.subr.mxu0 0.0
      %1192 = vmatpush1.msra.mxu0 0.0
      %1193 = vmatprep.subr.mxu0 0.0
      %1194 = vmatpush1.msra.mxu0 0.0
      %1195 = vmatprep.subr.mxu0 0.0
      %1196 = vmatpush1.msra.mxu0 0.0
      %1197 = vmatprep.subr.mxu0 0.0
      %1198 = vmatpush1.msra.mxu0 0.0
      %1199 = vmatprep.subr.mxu0 0.0
      %1200 = vmatpush1.msra.mxu0 0.0
      %1201 = vmatprep.subr.mxu0 0.0
      %1202 = vmatpush1.msra.mxu0 0.0
      %1203 = vmatprep.subr.mxu0 0.0
      %1204 = vmatpush1.msra.mxu0 0.0
      %1205 = vmatprep.subr.mxu0 0.0
      %1206 = vmatpush1.msra.mxu0 0.0
      %1207 = vmatprep.subr.mxu0 0.0
      %1208 = vmatpush1.msra.mxu0 0.0
      %1209 = vmatprep.subr.mxu0 0.0
      %1210 = vmatpush1.msra.mxu0 0.0
      %1211 = vmatprep.subr.mxu0 0.0
      %1212 = vmatpush1.msra.mxu0 0.0
      %1213 = vmatprep.subr.mxu0 0.0
      %1214 = vmatpush1.msra.mxu0 0.0
      %1215 = vmatprep.subr.mxu0 0.0
      %1216 = vmatpush1.msra.mxu0 0.0
      %1217 = vmatprep.mubr.f32.mxu0 0.0
      %1218 = vmatmul.mubr.f32.gmra.mrb[0].mxu0 %v1151
      %v1219 = vpop.f32.mrb[0].mxu0
      %v1220 = vadd.f32 0.0, %v1219
      %v1221 = vpop.f32.mrb[0].mxu0
      %1222 = vdwg.mxu0
      %v1224 = vsel %vm1076, %v912, 0
      %1226 = vmatprep.subr.mxu0 0.0
      %1227 = vmatpush1.msra.mxu0 %v1070
      %1228 = vmatprep.subr.mxu0 0.0
      %1229 = vmatpush1.msra.mxu0 0.0
      %1230 = vmatprep.subr.mxu0 0.0
      %1231 = vmatpush1.msra.mxu0 0.0
      %1232 = vmatprep.subr.mxu0 0.0
      %1233 = vmatpush1.msra.mxu0 0.0
      %1234 = vmatprep.subr.mxu0 0.0
      %1235 = vmatpush1.msra.mxu0 0.0
      %1236 = vmatprep.subr.mxu0 0.0
      %1237 = vmatpush1.msra.mxu0 0.0
      %1238 = vmatprep.subr.mxu0 0.0
      %1239 = vmatpush1.msra.mxu0 0.0
      %1240 = vmatprep.subr.mxu0 0.0
      %1241 = vmatpush1.msra.mxu0 0.0
      %1242 = vmatprep.subr.mxu0 0.0
      %1243 = vmatpush1.msra.mxu0 0.0
      %1244 = vmatprep.subr.mxu0 0.0
      %1245 = vmatpush1.msra.mxu0 0.0
      %1246 = vmatprep.subr.mxu0 0.0
      %1247 = vmatpush1.msra.mxu0 0.0
      %1248 = vmatprep.subr.mxu0 0.0
      %1249 = vmatpush1.msra.mxu0 0.0
      %1250 = vmatprep.subr.mxu0 0.0
      %1251 = vmatpush1.msra.mxu0 0.0
      %1252 = vmatprep.subr.mxu0 0.0
      %1253 = vmatpush1.msra.mxu0 0.0
      %1254 = vmatprep.subr.mxu0 0.0
      %1255 = vmatpush1.msra.mxu0 0.0
      %1256 = vmatprep.subr.mxu0 0.0
      %1257 = vmatpush1.msra.mxu0 0.0
      %1258 = vmatprep.subr.mxu0 0.0
      %1259 = vmatpush1.msra.mxu0 0.0
      %1260 = vmatprep.subr.mxu0 0.0
      %1261 = vmatpush1.msra.mxu0 0.0
      %1262 = vmatprep.subr.mxu0 0.0
      %1263 = vmatpush1.msra.mxu0 0.0
      %1264 = vmatprep.subr.mxu0 0.0
      %1265 = vmatpush1.msra.mxu0 0.0
      %1266 = vmatprep.subr.mxu0 0.0
      %1267 = vmatpush1.msra.mxu0 0.0
      %1268 = vmatprep.subr.mxu0 0.0
      %1269 = vmatpush1.msra.mxu0 0.0
      %1270 = vmatprep.subr.mxu0 0.0
      %1271 = vmatpush1.msra.mxu0 0.0
      %1272 = vmatprep.subr.mxu0 0.0
      %1273 = vmatpush1.msra.mxu0 0.0
      %1274 = vmatprep.subr.mxu0 0.0
      %1275 = vmatpush1.msra.mxu0 0.0
      %1276 = vmatprep.subr.mxu0 0.0
      %1277 = vmatpush1.msra.mxu0 0.0
      %1278 = vmatprep.subr.mxu0 0.0
      %1279 = vmatpush1.msra.mxu0 0.0
      %1280 = vmatprep.subr.mxu0 0.0
      %1281 = vmatpush1.msra.mxu0 0.0
      %1282 = vmatprep.subr.mxu0 0.0
      %1283 = vmatpush1.msra.mxu0 0.0
      %1284 = vmatprep.subr.mxu0 0.0
      %1285 = vmatpush1.msra.mxu0 0.0
      %1286 = vmatprep.subr.mxu0 0.0
      %1287 = vmatpush1.msra.mxu0 0.0
      %1288 = vmatprep.subr.mxu0 0.0
      %1289 = vmatpush1.msra.mxu0 0.0
      %1290 = vmatprep.mubr.f32.mxu0 0.0
      %1291 = vmatmul.mubr.f32.gmra.mrb[0].mxu0 %v1224
      %v1292 = vpop.f32.mrb[0].mxu0
      %v1293 = vadd.f32 0.0, %v1292
      %v1294 = vpop.f32.mrb[0].mxu0
      %1295 = vdwg.mxu0
      %v1297 = vsel %vm1076, %v914, 0
      %1299 = vmatprep.subr.mxu0 0.0
      %1300 = vmatpush1.msra.mxu0 %v1071
      %1301 = vmatprep.subr.mxu0 0.0
      %1302 = vmatpush1.msra.mxu0 0.0
      %1303 = vmatprep.subr.mxu0 0.0
      %1304 = vmatpush1.msra.mxu0 0.0
      %1305 = vmatprep.subr.mxu0 0.0
      %1306 = vmatpush1.msra.mxu0 0.0
      %1307 = vmatprep.subr.mxu0 0.0
      %1308 = vmatpush1.msra.mxu0 0.0
      %1309 = vmatprep.subr.mxu0 0.0
      %1310 = vmatpush1.msra.mxu0 0.0
      %1311 = vmatprep.subr.mxu0 0.0
      %1312 = vmatpush1.msra.mxu0 0.0
      %1313 = vmatprep.subr.mxu0 0.0
      %1314 = vmatpush1.msra.mxu0 0.0
      %1315 = vmatprep.subr.mxu0 0.0
      %1316 = vmatpush1.msra.mxu0 0.0
      %1317 = vmatprep.subr.mxu0 0.0
      %1318 = vmatpush1.msra.mxu0 0.0
      %1319 = vmatprep.subr.mxu0 0.0
      %1320 = vmatpush1.msra.mxu0 0.0
      %1321 = vmatprep.subr.mxu0 0.0
      %1322 = vmatpush1.msra.mxu0 0.0
      %1323 = vmatprep.subr.mxu0 0.0
      %1324 = vmatpush1.msra.mxu0 0.0
      %1325 = vmatprep.subr.mxu0 0.0
      %1326 = vmatpush1.msra.mxu0 0.0
      %1327 = vmatprep.subr.mxu0 0.0
      %1328 = vmatpush1.msra.mxu0 0.0
      %1329 = vmatprep.subr.mxu0 0.0
      %1330 = vmatpush1.msra.mxu0 0.0
      %1331 = vmatprep.subr.mxu0 0.0
      %1332 = vmatpush1.msra.mxu0 0.0
      %1333 = vmatprep.subr.mxu0 0.0
      %1334 = vmatpush1.msra.mxu0 0.0
      %1335 = vmatprep.subr.mxu0 0.0
      %1336 = vmatpush1.msra.mxu0 0.0
      %1337 = vmatprep.subr.mxu0 0.0
      %1338 = vmatpush1.msra.mxu0 0.0
      %1339 = vmatprep.subr.mxu0 0.0
      %1340 = vmatpush1.msra.mxu0 0.0
      %1341 = vmatprep.subr.mxu0 0.0
      %1342 = vmatpush1.msra.mxu0 0.0
      %1343 = vmatprep.subr.mxu0 0.0
      %1344 = vmatpush1.msra.mxu0 0.0
      %1345 = vmatprep.subr.mxu0 0.0
      %1346 = vmatpush1.msra.mxu0 0.0
      %1347 = vmatprep.subr.mxu0 0.0
      %1348 = vmatpush1.msra.mxu0 0.0
      %1349 = vmatprep.subr.mxu0 0.0
      %1350 = vmatpush1.msra.mxu0 0.0
      %1351 = vmatprep.subr.mxu0 0.0
      %1352 = vmatpush1.msra.mxu0 0.0
      %1353 = vmatprep.subr.mxu0 0.0
      %1354 = vmatpush1.msra.mxu0 0.0
      %1355 = vmatprep.subr.mxu0 0.0
      %1356 = vmatpush1.msra.mxu0 0.0
      %1357 = vmatprep.subr.mxu0 0.0
      %1358 = vmatpush1.msra.mxu0 0.0
      %1359 = vmatprep.subr.mxu0 0.0
      %1360 = vmatpush1.msra.mxu0 0.0
      %1361 = vmatprep.subr.mxu0 0.0
      %1362 = vmatpush1.msra.mxu0 0.0
      %1363 = vmatprep.mubr.f32.mxu0 0.0
      %1364 = vmatmul.mubr.f32.gmra.mrb[0].mxu0 %v1297
      %v1365 = vpop.f32.mrb[0].mxu0
      %v1366 = vadd.f32 0.0, %v1365
      %v1367 = vpop.f32.mrb[0].mxu0
      %1368 = vdwg.mxu0
      %v1370 = vsel %vm1076, %v916, 0
      %1372 = vmatprep.subr.mxu0 0.0
      %1373 = vmatpush1.msra.mxu0 %v1072
      %1374 = vmatprep.subr.mxu0 0.0
      %1375 = vmatpush1.msra.mxu0 0.0
      %1376 = vmatprep.subr.mxu0 0.0
      %1377 = vmatpush1.msra.mxu0 0.0
      %1378 = vmatprep.subr.mxu0 0.0
      %1379 = vmatpush1.msra.mxu0 0.0
      %1380 = vmatprep.subr.mxu0 0.0
      %1381 = vmatpush1.msra.mxu0 0.0
      %1382 = vmatprep.subr.mxu0 0.0
      %1383 = vmatpush1.msra.mxu0 0.0
      %1384 = vmatprep.subr.mxu0 0.0
      %1385 = vmatpush1.msra.mxu0 0.0
      %1386 = vmatprep.subr.mxu0 0.0
      %1387 = vmatpush1.msra.mxu0 0.0
      %1388 = vmatprep.subr.mxu0 0.0
      %1389 = vmatpush1.msra.mxu0 0.0
      %1390 = vmatprep.subr.mxu0 0.0
      %1391 = vmatpush1.msra.mxu0 0.0
      %1392 = vmatprep.subr.mxu0 0.0
      %1393 = vmatpush1.msra.mxu0 0.0
      %1394 = vmatprep.subr.mxu0 0.0
      %1395 = vmatpush1.msra.mxu0 0.0
      %1396 = vmatprep.subr.mxu0 0.0
      %1397 = vmatpush1.msra.mxu0 0.0
      %1398 = vmatprep.subr.mxu0 0.0
      %1399 = vmatpush1.msra.mxu0 0.0
      %1400 = vmatprep.subr.mxu0 0.0
      %1401 = vmatpush1.msra.mxu0 0.0
      %1402 = vmatprep.subr.mxu0 0.0
      %1403 = vmatpush1.msra.mxu0 0.0
      %1404 = vmatprep.subr.mxu0 0.0
      %1405 = vmatpush1.msra.mxu0 0.0
      %1406 = vmatprep.subr.mxu0 0.0
      %1407 = vmatpush1.msra.mxu0 0.0
      %1408 = vmatprep.subr.mxu0 0.0
      %1409 = vmatpush1.msra.mxu0 0.0
      %1410 = vmatprep.subr.mxu0 0.0
      %1411 = vmatpush1.msra.mxu0 0.0
      %1412 = vmatprep.subr.mxu0 0.0
      %1413 = vmatpush1.msra.mxu0 0.0
      %1414 = vmatprep.subr.mxu0 0.0
      %1415 = vmatpush1.msra.mxu0 0.0
      %1416 = vmatprep.subr.mxu0 0.0
      %1417 = vmatpush1.msra.mxu0 0.0
      %1418 = vmatprep.subr.mxu0 0.0
      %1419 = vmatpush1.msra.mxu0 0.0
      %1420 = vmatprep.subr.mxu0 0.0
      %1421 = vmatpush1.msra.mxu0 0.0
      %1422 = vmatprep.subr.mxu0 0.0
      %1423 = vmatpush1.msra.mxu0 0.0
      %1424 = vmatprep.subr.mxu0 0.0
      %1425 = vmatpush1.msra.mxu0 0.0
      %1426 = vmatprep.subr.mxu0 0.0
      %1427 = vmatpush1.msra.mxu0 0.0
      %1428 = vmatprep.subr.mxu0 0.0
      %1429 = vmatpush1.msra.mxu0 0.0
      %1430 = vmatprep.subr.mxu0 0.0
      %1431 = vmatpush1.msra.mxu0 0.0
      %1432 = vmatprep.subr.mxu0 0.0
      %1433 = vmatpush1.msra.mxu0 0.0
      %1434 = vmatprep.subr.mxu0 0.0
      %1435 = vmatpush1.msra.mxu0 0.0
      %1436 = vmatprep.mubr.f32.mxu0 0.0
      %1437 = vmatmul.mubr.f32.gmra.mrb[0].mxu0 %v1370
      %v1438 = vpop.f32.mrb[0].mxu0
      %v1439 = vadd.f32 0.0, %v1438
      %v1440 = vpop.f32.mrb[0].mxu0
      %1441 = vdwg.mxu0
      %v1443 = vsel %vm1076, %v918, 0
      %1445 = vmatprep.subr.mxu0 0.0
      %1446 = vmatpush1.msra.mxu0 %v1073
      %1447 = vmatprep.subr.mxu0 0.0
      %1448 = vmatpush1.msra.mxu0 0.0
      %1449 = vmatprep.subr.mxu0 0.0
      %1450 = vmatpush1.msra.mxu0 0.0
      %1451 = vmatprep.subr.mxu0 0.0
      %1452 = vmatpush1.msra.mxu0 0.0
      %1453 = vmatprep.subr.mxu0 0.0
      %1454 = vmatpush1.msra.mxu0 0.0
      %1455 = vmatprep.subr.mxu0 0.0
      %1456 = vmatpush1.msra.mxu0 0.0
      %1457 = vmatprep.subr.mxu0 0.0
      %1458 = vmatpush1.msra.mxu0 0.0
      %1459 = vmatprep.subr.mxu0 0.0
      %1460 = vmatpush1.msra.mxu0 0.0
      %1461 = vmatprep.subr.mxu0 0.0
      %1462 = vmatpush1.msra.mxu0 0.0
      %1463 = vmatprep.subr.mxu0 0.0
      %1464 = vmatpush1.msra.mxu0 0.0
      %1465 = vmatprep.subr.mxu0 0.0
      %1466 = vmatpush1.msra.mxu0 0.0
      %1467 = vmatprep.subr.mxu0 0.0
      %1468 = vmatpush1.msra.mxu0 0.0
      %1469 = vmatprep.subr.mxu0 0.0
      %1470 = vmatpush1.msra.mxu0 0.0
      %1471 = vmatprep.subr.mxu0 0.0
      %1472 = vmatpush1.msra.mxu0 0.0
      %1473 = vmatprep.subr.mxu0 0.0
      %1474 = vmatpush1.msra.mxu0 0.0
      %1475 = vmatprep.subr.mxu0 0.0
      %1476 = vmatpush1.msra.mxu0 0.0
      %1477 = vmatprep.subr.mxu0 0.0
      %1478 = vmatpush1.msra.mxu0 0.0
      %1479 = vmatprep.subr.mxu0 0.0
      %1480 = vmatpush1.msra.mxu0 0.0
      %1481 = vmatprep.subr.mxu0 0.0
      %1482 = vmatpush1.msra.mxu0 0.0
      %1483 = vmatprep.subr.mxu0 0.0
      %1484 = vmatpush1.msra.mxu0 0.0
      %1485 = vmatprep.subr.mxu0 0.0
      %1486 = vmatpush1.msra.mxu0 0.0
      %1487 = vmatprep.subr.mxu0 0.0
      %1488 = vmatpush1.msra.mxu0 0.0
      %1489 = vmatprep.subr.mxu0 0.0
      %1490 = vmatpush1.msra.mxu0 0.0
      %1491 = vmatprep.subr.mxu0 0.0
      %1492 = vmatpush1.msra.mxu0 0.0
      %1493 = vmatprep.subr.mxu0 0.0
      %1494 = vmatpush1.msra.mxu0 0.0
      %1495 = vmatprep.subr.mxu0 0.0
      %1496 = vmatpush1.msra.mxu0 0.0
      %1497 = vmatprep.subr.mxu0 0.0
      %1498 = vmatpush1.msra.mxu0 0.0
      %1499 = vmatprep.subr.mxu0 0.0
      %1500 = vmatpush1.msra.mxu0 0.0
      %1501 = vmatprep.subr.mxu0 0.0
      %1502 = vmatpush1.msra.mxu0 0.0
      %1503 = vmatprep.subr.mxu0 0.0
      %1504 = vmatpush1.msra.mxu0 0.0
      %1505 = vmatprep.subr.mxu0 0.0
      %1506 = vmatpush1.msra.mxu0 0.0
      %1507 = vmatprep.subr.mxu0 0.0
      %1508 = vmatpush1.msra.mxu0 0.0
      %1509 = vmatprep.mubr.f32.mxu0 0.0
      %1510 = vmatmul.mubr.f32.gmra.mrb[0].mxu0 %v1443
      %v1511 = vpop.f32.mrb[0].mxu0
      %v1512 = vadd.f32 0.0, %v1511
      %v1513 = vpop.f32.mrb[0].mxu0
      %1514 = vdwg.mxu0
      %v1516 = vsel %vm1076, %v920, 0
      %1518 = vmatprep.subr.mxu0 0.0
      %1519 = vmatpush1.msra.mxu0 %v1074
      %1520 = vmatprep.subr.mxu0 0.0
      %1521 = vmatpush1.msra.mxu0 0.0
      %1522 = vmatprep.subr.mxu0 0.0
      %1523 = vmatpush1.msra.mxu0 0.0
      %1524 = vmatprep.subr.mxu0 0.0
      %1525 = vmatpush1.msra.mxu0 0.0
      %1526 = vmatprep.subr.mxu0 0.0
      %1527 = vmatpush1.msra.mxu0 0.0
      %1528 = vmatprep.subr.mxu0 0.0
      %1529 = vmatpush1.msra.mxu0 0.0
      %1530 = vmatprep.subr.mxu0 0.0
      %1531 = vmatpush1.msra.mxu0 0.0
      %1532 = vmatprep.subr.mxu0 0.0
      %1533 = vmatpush1.msra.mxu0 0.0
      %1534 = vmatprep.subr.mxu0 0.0
      %1535 = vmatpush1.msra.mxu0 0.0
      %1536 = vmatprep.subr.mxu0 0.0
      %1537 = vmatpush1.msra.mxu0 0.0
      %1538 = vmatprep.subr.mxu0 0.0
      %1539 = vmatpush1.msra.mxu0 0.0
      %1540 = vmatprep.subr.mxu0 0.0
      %1541 = vmatpush1.msra.mxu0 0.0
      %1542 = vmatprep.subr.mxu0 0.0
      %1543 = vmatpush1.msra.mxu0 0.0
      %1544 = vmatprep.subr.mxu0 0.0
      %1545 = vmatpush1.msra.mxu0 0.0
      %1546 = vmatprep.subr.mxu0 0.0
      %1547 = vmatpush1.msra.mxu0 0.0
      %1548 = vmatprep.subr.mxu0 0.0
      %1549 = vmatpush1.msra.mxu0 0.0
      %1550 = vmatprep.subr.mxu0 0.0
      %1551 = vmatpush1.msra.mxu0 0.0
      %1552 = vmatprep.subr.mxu0 0.0
      %1553 = vmatpush1.msra.mxu0 0.0
      %1554 = vmatprep.subr.mxu0 0.0
      %1555 = vmatpush1.msra.mxu0 0.0
      %1556 = vmatprep.subr.mxu0 0.0
      %1557 = vmatpush1.msra.mxu0 0.0
      %1558 = vmatprep.subr.mxu0 0.0
      %1559 = vmatpush1.msra.mxu0 0.0
      %1560 = vmatprep.subr.mxu0 0.0
      %1561 = vmatpush1.msra.mxu0 0.0
      %1562 = vmatprep.subr.mxu0 0.0
      %1563 = vmatpush1.msra.mxu0 0.0
      %1564 = vmatprep.subr.mxu0 0.0
      %1565 = vmatpush1.msra.mxu0 0.0
      %1566 = vmatprep.subr.mxu0 0.0
      %1567 = vmatpush1.msra.mxu0 0.0
      %1568 = vmatprep.subr.mxu0 0.0
      %1569 = vmatpush1.msra.mxu0 0.0
      %1570 = vmatprep.subr.mxu0 0.0
      %1571 = vmatpush1.msra.mxu0 0.0
      %1572 = vmatprep.subr.mxu0 0.0
      %1573 = vmatpush1.msra.mxu0 0.0
      %1574 = vmatprep.subr.mxu0 0.0
      %1575 = vmatpush1.msra.mxu0 0.0
      %1576 = vmatprep.subr.mxu0 0.0
      %1577 = vmatpush1.msra.mxu0 0.0
      %1578 = vmatprep.subr.mxu0 0.0
      %1579 = vmatpush1.msra.mxu0 0.0
      %1580 = vmatprep.subr.mxu0 0.0
      %1581 = vmatpush1.msra.mxu0 0.0
      %1582 = vmatprep.mubr.f32.mxu0 0.0
      %1583 = vmatmul.mubr.f32.gmra.mrb[0].mxu0 %v1516
      %v1584 = vpop.f32.mrb[0].mxu0
      %v1585 = vadd.f32 0.0, %v1584
      %v1586 = vpop.f32.mrb[0].mxu0
      %1587 = vdwg.mxu0
      %v1589 = vsel %vm1076, %v922, 0
      %1591 = vmatprep.subr.mxu0 0.0
      %1592 = vmatpush1.msra.mxu0 %v1075
      %1593 = vmatprep.subr.mxu0 0.0
      %1594 = vmatpush1.msra.mxu0 0.0
      %1595 = vmatprep.subr.mxu0 0.0
      %1596 = vmatpush1.msra.mxu0 0.0
      %1597 = vmatprep.subr.mxu0 0.0
      %1598 = vmatpush1.msra.mxu0 0.0
      %1599 = vmatprep.subr.mxu0 0.0
      %1600 = vmatpush1.msra.mxu0 0.0
      %1601 = vmatprep.subr.mxu0 0.0
      %1602 = vmatpush1.msra.mxu0 0.0
      %1603 = vmatprep.subr.mxu0 0.0
      %1604 = vmatpush1.msra.mxu0 0.0
      %1605 = vmatprep.subr.mxu0 0.0
      %1606 = vmatpush1.msra.mxu0 0.0
      %1607 = vmatprep.subr.mxu0 0.0
      %1608 = vmatpush1.msra.mxu0 0.0
      %1609 = vmatprep.subr.mxu0 0.0
      %1610 = vmatpush1.msra.mxu0 0.0
      %1611 = vmatprep.subr.mxu0 0.0
      %1612 = vmatpush1.msra.mxu0 0.0
      %1613 = vmatprep.subr.mxu0 0.0
      %1614 = vmatpush1.msra.mxu0 0.0
      %1615 = vmatprep.subr.mxu0 0.0
      %1616 = vmatpush1.msra.mxu0 0.0
      %1617 = vmatprep.subr.mxu0 0.0
      %1618 = vmatpush1.msra.mxu0 0.0
      %1619 = vmatprep.subr.mxu0 0.0
      %1620 = vmatpush1.msra.mxu0 0.0
      %1621 = vmatprep.subr.mxu0 0.0
      %1622 = vmatpush1.msra.mxu0 0.0
      %1623 = vmatprep.subr.mxu0 0.0
      %1624 = vmatpush1.msra.mxu0 0.0
      %1625 = vmatprep.subr.mxu0 0.0
      %1626 = vmatpush1.msra.mxu0 0.0
      %1627 = vmatprep.subr.mxu0 0.0
      %1628 = vmatpush1.msra.mxu0 0.0
      %1629 = vmatprep.subr.mxu0 0.0
      %1630 = vmatpush1.msra.mxu0 0.0
      %1631 = vmatprep.subr.mxu0 0.0
      %1632 = vmatpush1.msra.mxu0 0.0
      %1633 = vmatprep.subr.mxu0 0.0
      %1634 = vmatpush1.msra.mxu0 0.0
      %1635 = vmatprep.subr.mxu0 0.0
      %1636 = vmatpush1.msra.mxu0 0.0
      %1637 = vmatprep.subr.mxu0 0.0
      %1638 = vmatpush1.msra.mxu0 0.0
      %1639 = vmatprep.subr.mxu0 0.0
      %1640 = vmatpush1.msra.mxu0 0.0
      %1641 = vmatprep.subr.mxu0 0.0
      %1642 = vmatpush1.msra.mxu0 0.0
      %1643 = vmatprep.subr.mxu0 0.0
      %1644 = vmatpush1.msra.mxu0 0.0
      %1645 = vmatprep.subr.mxu0 0.0
      %1646 = vmatpush1.msra.mxu0 0.0
      %1647 = vmatprep.subr.mxu0 0.0
      %1648 = vmatpush1.msra.mxu0 0.0
      %1649 = vmatprep.subr.mxu0 0.0
      %1650 = vmatpush1.msra.mxu0 0.0
      %1651 = vmatprep.subr.mxu0 0.0
      %1652 = vmatpush1.msra.mxu0 0.0
      %1653 = vmatprep.subr.mxu0 0.0
      %1654 = vmatpush1.msra.mxu0 0.0
      %1655 = vmatprep.mubr.f32.mxu0 0.0
      %1656 = vmatmul.mubr.f32.gmra.mrb[0].mxu0 %v1589
      %v1657 = vpop.f32.mrb[0].mxu0
      %v1658 = vadd.f32 0.0, %v1657
      %v1659 = vpop.f32.mrb[0].mxu0
      %1660 = vdwg.mxu0
      %v1661 = vadd.f32 %v1060, %v1147
      %v1662 = vadd.f32 %v1061, %v1220
      %v1663 = vadd.f32 %v1062, %v1293
      %v1664 = vadd.f32 %v1063, %v1366
      %v1665 = vadd.f32 %v1064, %v1439
      %v1666 = vadd.f32 %v1065, %v1512
      %v1667 = vadd.f32 %v1066, %v1585
      %v1668 = vadd.f32 %v1067, %v1658
      %vm1669 = vcmask 253952
      %1670 = vst.msk [vmem:[#allocation4] sm:$0x1] %vm1669, %v1661
      %1671 = vst.msk [vmem:[#allocation4 + $0x1] sm:$0x1] %vm1669, %v1662
      %1672 = vst.msk [vmem:[#allocation4 + $0x2] sm:$0x1] %vm1669, %v1663
      %1673 = vst.msk [vmem:[#allocation4 + $0x3] sm:$0x1] %vm1669, %v1664
      %1674 = vst.msk [vmem:[#allocation4 + $0x4] sm:$0x1] %vm1669, %v1665
      %1675 = vst.msk [vmem:[#allocation4 + $0x5] sm:$0x1] %vm1669, %v1666
      %1676 = vst.msk [vmem:[#allocation4 + $0x6] sm:$0x1] %vm1669, %v1667
      %1677 = vst.msk [vmem:[#allocation4 + $0x7] sm:$0x1] %vm1669, %v1668
      %1678 = vst.msk [vmem:[#allocation2] sm:$0x1] %vm971, %v795
      %1679 = vst.msk [vmem:[#allocation2 + $0x1] sm:$0x1] %vm971, %v796
      %1680 = vst.msk [vmem:[#allocation2 + $0x2] sm:$0x1] %vm971, %v797
      %1681 = vst.msk [vmem:[#allocation2 + $0x3] sm:$0x1] %vm971, %v798
      %1682 = vst.msk [vmem:[#allocation2 + $0x4] sm:$0x1] %vm971, %v799
      %1683 = vst.msk [vmem:[#allocation2 + $0x5] sm:$0x1] %vm971, %v800
      %1684 = vst.msk [vmem:[#allocation2 + $0x6] sm:$0x1] %vm971, %v801
      %1685 = vst.msk [vmem:[#allocation2 + $0x7] sm:$0x1] %vm971, %v802
    $region33: #{tpu_custom_call.1} parent=1 // pred_fallthru
      _
    // Predicated region
    $region34: #{tpu_custom_call.1} parent=1 // pred_check
      %p1686 = pneg %p78
    $region35: #{tpu_custom_call.1} parent=1 // pred_check_branch
      %1688 = sbr.rel (%p1686) target = $region37
    $region36: #{tpu_custom_call.1} parent=1 // pred_region
      %v1689 = vld [vmem:[#allocation4] sm:$0x1]
      %v1690 = vld [vmem:[#allocation4 + $0x1] sm:$0x1]
      %v1691 = vld [vmem:[#allocation4 + $0x2] sm:$0x1]
      %v1692 = vld [vmem:[#allocation4 + $0x3] sm:$0x1]
      %v1693 = vld [vmem:[#allocation4 + $0x4] sm:$0x1]
      %v1694 = vld [vmem:[#allocation4 + $0x5] sm:$0x1]
      %v1695 = vld [vmem:[#allocation4 + $0x6] sm:$0x1]
      %v1696 = vld [vmem:[#allocation4 + $0x7] sm:$0x1]
      %v1697 = vld [vmem:[#allocation3] sm:$0x1]
      %v1698 = vld [vmem:[#allocation3 + $0x1] sm:$0x1]
      %v1699 = vld [vmem:[#allocation3 + $0x2] sm:$0x1]
      %v1700 = vld [vmem:[#allocation3 + $0x3] sm:$0x1]
      %v1701 = vld [vmem:[#allocation3 + $0x4] sm:$0x1]
      %v1702 = vld [vmem:[#allocation3 + $0x5] sm:$0x1]
      %v1703 = vld [vmem:[#allocation3 + $0x6] sm:$0x1]
      %v1704 = vld [vmem:[#allocation3 + $0x7] sm:$0x1]
      %1706 = vset.pattern.permute.xlu0 0
      %1707 = vperm.xlu0 %1706, %v1697
      %v1708 = vpop.permute.xlu0 %1707
      %v1710 = vlaneseq
      %v1711 = vshrl.u32 %v1710, 7
      %v1712 = vsub.s32 0, %v1711
      %v1713 = vrot.slane %v1708, %v1712
      %1715 = vset.pattern.permute.xlu0 0
      %1716 = vperm.xlu0 %1715, %v1698
      %v1717 = vpop.permute.xlu0 %1716
      %v1719 = vlaneseq
      %v1720 = vshrl.u32 %v1719, 7
      %v1721 = vsub.s32 0, %v1720
      %v1722 = vrot.slane %v1717, %v1721
      %1724 = vset.pattern.permute.xlu0 0
      %1725 = vperm.xlu0 %1724, %v1699
      %v1726 = vpop.permute.xlu0 %1725
      %v1728 = vlaneseq
      %v1729 = vshrl.u32 %v1728, 7
      %v1730 = vsub.s32 0, %v1729
      %v1731 = vrot.slane %v1726, %v1730
      %1733 = vset.pattern.permute.xlu0 0
      %1734 = vperm.xlu0 %1733, %v1700
      %v1735 = vpop.permute.xlu0 %1734
      %v1737 = vlaneseq
      %v1738 = vshrl.u32 %v1737, 7
      %v1739 = vsub.s32 0, %v1738
      %v1740 = vrot.slane %v1735, %v1739
      %1742 = vset.pattern.permute.xlu0 0
      %1743 = vperm.xlu0 %1742, %v1701
      %v1744 = vpop.permute.xlu0 %1743
      %v1746 = vlaneseq
      %v1747 = vshrl.u32 %v1746, 7
      %v1748 = vsub.s32 0, %v1747
      %v1749 = vrot.slane %v1744, %v1748
      %1751 = vset.pattern.permute.xlu0 0
      %1752 = vperm.xlu0 %1751, %v1702
      %v1753 = vpop.permute.xlu0 %1752
      %v1755 = vlaneseq
      %v1756 = vshrl.u32 %v1755, 7
      %v1757 = vsub.s32 0, %v1756
      %v1758 = vrot.slane %v1753, %v1757
      %1760 = vset.pattern.permute.xlu0 0
      %1761 = vperm.xlu0 %1760, %v1703
      %v1762 = vpop.permute.xlu0 %1761
      %v1764 = vlaneseq
      %v1765 = vshrl.u32 %v1764, 7
      %v1766 = vsub.s32 0, %v1765
      %v1767 = vrot.slane %v1762, %v1766
      %1769 = vset.pattern.permute.xlu0 0
      %1770 = vperm.xlu0 %1769, %v1704
      %v1771 = vpop.permute.xlu0 %1770
      %v1773 = vlaneseq
      %v1774 = vshrl.u32 %v1773, 7
      %v1775 = vsub.s32 0, %v1774
      %v1776 = vrot.slane %v1771, %v1775
      %v1777 = vrcp.pop %v1713
      %v1778 = vmul.f32 %v1689, %v1777
      %v1779 = vrcp.pop %v1722
      %v1780 = vmul.f32 %v1690, %v1779
      %v1781 = vrcp.pop %v1731
      %v1782 = vmul.f32 %v1691, %v1781
      %v1783 = vrcp.pop %v1740
      %v1784 = vmul.f32 %v1692, %v1783
      %v1785 = vrcp.pop %v1749
      %v1786 = vmul.f32 %v1693, %v1785
      %v1787 = vrcp.pop %v1758
      %v1788 = vmul.f32 %v1694, %v1787
      %v1789 = vrcp.pop %v1767
      %v1790 = vmul.f32 %v1695, %v1789
      %v1791 = vrcp.pop %v1776
      %v1792 = vmul.f32 %v1696, %v1791
      %vm1793 = vcmask 253952
      %1794 = vst.msk [vmem:[#allocation13] sm:$0x1] %vm1793, %v1778
      %1795 = vst.msk [vmem:[#allocation13 + $0x1] sm:$0x1] %vm1793, %v1780
      %1796 = vst.msk [vmem:[#allocation13 + $0x2] sm:$0x1] %vm1793, %v1782
      %1797 = vst.msk [vmem:[#allocation13 + $0x3] sm:$0x1] %vm1793, %v1784
      %1798 = vst.msk [vmem:[#allocation13 + $0x4] sm:$0x1] %vm1793, %v1786
      %1799 = vst.msk [vmem:[#allocation13 + $0x5] sm:$0x1] %vm1793, %v1788
      %1800 = vst.msk [vmem:[#allocation13 + $0x6] sm:$0x1] %vm1793, %v1790
      %1801 = vst.msk [vmem:[#allocation13 + $0x7] sm:$0x1] %vm1793, %v1792
    $region37: #{tpu_custom_call.1} parent=1 // pred_fallthru
      _
    // Predicated region
    $region38: #{tpu_custom_call.1} parent=1 // pred_check
      _
    $region39: #{tpu_custom_call.1} parent=1 // pred_check_branch
      %1803 = sbr.rel (0) target = $region41
    $region40: #{tpu_custom_call.1} parent=1 // pred_region
      %s1805 = ssub.s32 128, 128
      %1806 = vsyncadd [#allocation9], %s1805
      %s1807 = sshll.u32 [#allocation13], 4
      %s1808 = int_to_ptr.vmem [resolvable:$true] %s1807
      %1813 = dma.vmem_to_hbm [thread:$0]  %s1808, 128, %s4, [#allocation9], 16, 16, 1
    $region41: #{tpu_custom_call.1} parent=1 // pred_fallthru
      _
    // Predicated region
    $region42: #{tpu_custom_call.1} parent=1 // pred_check
      _
    $region43: #{tpu_custom_call.1} parent=1 // pred_check_branch
      %1815 = sbr.rel (0) target = $region45
    $region44: #{tpu_custom_call.1} parent=1 // pred_region
      %1816 = dma.done [#allocation9], 128
    $region45: #{tpu_custom_call.1} parent=1 // pred_fallthru
      _
    %1817 = vsyncpa [#allocation8], 1
    %1818 = vsyncpa [#allocation11], 1
    %1819 = vsyncpa [#allocation9], 1

</llo_original>
